<compile_context>
chip_gen: v7x
topology: tpu7x:2x2x1
jax: 0.10.0
libtpu: 0.0.40
codegen_flags: <defaults>
</compile_context>

<pallas_src>
import jax
import jax.numpy as jnp
from jax.experimental import pallas as pl
from jax.experimental.pallas import tpu as pltpu


def _make_kernel(n_layers, T, B_pad, B, H):
    """EIIE_rnn forward kernel for fixed layer count / seq len / padded batch."""

    def kernel(scal_ref, x_ref, w_ref, b_ref, out_ref):
        f32, bf16 = jnp.float32, jnp.bfloat16

        b_all = b_ref[...]                                   # (L+1, H) f32
        b_out = scal_ref[0]                                   # folded conv_w*b_lin + conv_b
        para = scal_ref[1]                                    # the `para` parameter

        # --- hoisted layer-0 input projection: one bf16 MXU call, bias folded.
        xproj = (jnp.dot(x_ref[...], w_ref[0], preferred_element_type=f32)
                 + b_all[0:1, :])                             # (T*B_pad, H) f32

        # --- load weights once; pre-broadcast per-layer biases (hoisted).
        w_hh = [w_ref[2 * l + 1] for l in range(n_layers)]    # (H, H) bf16
        w_ih = [w_ref[2 * l] for l in range(1, n_layers)]     # (H, H) bf16
        biases = [jnp.broadcast_to(b_all[l:l + 1, :], (B_pad, H))
                  for l in range(1, n_layers)]

        # --- Elman recurrence, statically unrolled over T.
        # h_t^l = tanh(x_t^l W_ih + h_{t-1}^l W_hh + b)   (weights pre-transposed)
        hs = [jnp.zeros((B_pad, H), bf16) for _ in range(n_layers)]
        for t in range(T):
            pre = (xproj[t * B_pad:(t + 1) * B_pad, :]
                   + jnp.dot(hs[0], w_hh[0], preferred_element_type=f32))
            inp = jnp.tanh(pre).astype(bf16)
            hs[0] = inp
            for l in range(1, n_layers):
                pre = (jnp.dot(inp, w_ih[l - 1], preferred_element_type=f32)
                       + jnp.dot(hs[l], w_hh[l], preferred_element_type=f32)
                       + biases[l - 1])
                inp = jnp.tanh(pre).astype(bf16)
                hs[l] = inp
        h_last = hs[-1].astype(f32)                           # (B_pad, H) == rnn_out[:, -1, :]

        # --- folded Linear(H,1) + Conv1d(1,1,k=1): VPU multiply + lane reduce.
        w_out = b_all[n_layers:n_layers + 1, :]               # (1, H) f32
        conv = jnp.sum(h_last * w_out, axis=-1, keepdims=True) + b_out   # (B_pad, 1)

        # --- softmax over [conv[:B], para]; padded rows masked out.
        row = jax.lax.broadcasted_iota(jnp.int32, (B_pad, 1), 0)
        valid = row <= B                                      # rows 0..B are real logits
        logits = jnp.where(row == B, para, conv)
        m = jnp.max(jnp.where(valid, logits, jnp.float32(-1e30)),
                    axis=0, keepdims=True)
        e = jnp.where(valid, jnp.exp(logits - m), 0.0)
        s = jnp.sum(e, axis=0, keepdims=True)
        out_ref[...] = e / s                                  # exact normalization

    return kernel


def prepare_params(params):
    """One-time host-side prep: pack weights/biases, fold the output head."""
    rnn = params["rnn"]
    n_layers = len(rnn)
    H = rnn[0][1].shape[0]
    F = rnn[0][0].shape[0]
    # TODO(synk): F > n_hidden would need a separately-shaped first-layer weight input.
    assert F <= H, "prepare_params assumes n_features <= n_hidden"

    w_ih0, w_hh0, b0 = rnn[0]
    w_ih0_p = jnp.zeros((H, H), jnp.float32).at[:F].set(w_ih0)   # pad feature rows to H
    w_stack = [w_ih0_p, w_hh0]
    b_rows = [b0]
    for (w_ih, w_hh, b) in rnn[1:]:
        w_stack += [w_ih, w_hh]
        b_rows.append(b)

    # Fold Linear(n_hidden, 1) and Conv1d(1, 1, k=1) into one affine map.
    w_out_row = (params["conv_w"] * params["w_lin"]).T           # (1, H)
    b_rows.append(w_out_row)
    b_out = (params["conv_w"] * params["b_lin"] + params["conv_b"]).reshape(())

    return {
        "w_all": jnp.stack(w_stack).astype(jnp.bfloat16),        # (2L, H, H) bf16
        "b_all": jnp.concatenate(b_rows, axis=0).astype(jnp.float32),  # (L+1, H) f32
        "scal": jnp.stack([b_out, params["para"].reshape(())]).astype(jnp.float32),  # (2,)
    }


@jax.jit
def eiie_rnn_forward(x, prepped):
    """x: (B, T, F) float32 (batch-first, like the PyTorch module). Returns (B+1,)."""
    B, T, F = x.shape
    w_all, b_all, scal = prepped["w_all"], prepped["b_all"], prepped["scal"]
    n_layers = w_all.shape[0] // 2
    H = w_all.shape[-1]
    B_pad = ((B + 1 + 7) // 8) * 8   # sublane alignment + room for the `para` row

    # Layout prep (fused under jit): pad batch & features, time-major, flatten, bf16.
    x_p = jnp.pad(x, ((0, B_pad - B), (0, 0), (0, H - F)))
    x_2d = jnp.transpose(x_p, (1, 0, 2)).reshape(T * B_pad, H).astype(jnp.bfloat16)

    out = pl.pallas_call(
        _make_kernel(n_layers, T, B_pad, B, H),
        out_shape=jax.ShapeDtypeStruct((B_pad, 1), jnp.float32),
        in_specs=[
            pl.BlockSpec(memory_space=pltpu.MemorySpace.SMEM),   # (2,) scalars
            pl.BlockSpec(memory_space=pltpu.MemorySpace.VMEM),   # x_2d
            pl.BlockSpec(memory_space=pltpu.MemorySpace.VMEM),   # weight slab
            pl.BlockSpec(memory_space=pltpu.MemorySpace.VMEM),   # bias/row slab
        ],
        out_specs=pl.BlockSpec(memory_space=pltpu.MemorySpace.VMEM),
    )(scal, x_2d, w_all, b_all)
    return out[:B + 1, 0]


def init_params(key, n_features, layer_num, n_hidden):
    """Deterministic synthetic parameters with the same shapes as the PyTorch module.

    NOTE: weights are stored already transposed relative to PyTorch nn.RNN's
    (hidden, input)/(hidden, hidden) convention; kernel and reference are
    mutually consistent. Importing real torch weights requires a transpose.
    """
    keys = jax.random.split(key, 4 * layer_num + 4)
    scale = 1.0 / jnp.sqrt(jnp.float32(n_hidden))
    ki = 0
    rnn = []
    in_dim = n_features
    for _ in range(layer_num):
        w_ih = jax.random.uniform(keys[ki], (in_dim, n_hidden), jnp.float32, -scale, scale); ki += 1
        w_hh = jax.random.uniform(keys[ki], (n_hidden, n_hidden), jnp.float32, -scale, scale); ki += 1
        b_ih = jax.random.uniform(keys[ki], (1, n_hidden), jnp.float32, -scale, scale); ki += 1
        b_hh = jax.random.uniform(keys[ki], (1, n_hidden), jnp.float32, -scale, scale); ki += 1
        rnn.append((w_ih, w_hh, b_ih + b_hh))
        in_dim = n_hidden
    w_lin = jax.random.uniform(keys[ki], (n_hidden, 1), jnp.float32, -scale, scale); ki += 1
    b_lin = jax.random.uniform(keys[ki], (1, 1), jnp.float32, -scale, scale); ki += 1
    conv_w = jax.random.uniform(keys[ki], (1, 1), jnp.float32, -1.0, 1.0); ki += 1
    conv_b = jax.random.uniform(keys[ki], (1, 1), jnp.float32, -1.0, 1.0); ki += 1
    para = jnp.ones((1, 1), jnp.float32)                  # torch.ones(1) parameter
    return {"rnn": rnn, "w_lin": w_lin, "b_lin": b_lin,
            "conv_w": conv_w, "conv_b": conv_b, "para": para}


def reference_forward(x, params):
    """Pure-JAX f32 reference matching the PyTorch forward semantics."""
    B, T, _ = x.shape
    rnn = params["rnn"]
    hs = [jnp.zeros((B, w_hh.shape[0]), jnp.float32) for (_, w_hh, _) in rnn]
    for t in range(T):
        inp = x[:, t, :]
        for l, (w_ih, w_hh, b) in enumerate(rnn):
            hs[l] = jnp.tanh(inp @ w_ih + hs[l] @ w_hh + b)
            inp = hs[l]
    lin = hs[-1] @ params["w_lin"] + params["b_lin"]
    conv = params["conv_w"] * lin + params["conv_b"]
    logits = jnp.concatenate([conv.reshape(-1), params["para"].reshape(-1)], axis=0)
    return jax.nn.softmax(logits, axis=0)


if __name__ == "__main__":
    B, T, F, H, L = 4, 8, 8, 32, 2      # batch, seq, n_features, n_hidden, layer_num
    key = jax.random.PRNGKey(0)
    kx, kp = jax.random.split(key)
    x = jax.random.normal(kx, (B, T, F), jnp.float32)
    params = init_params(kp, F, L, H)

    prepped = prepare_params(params)            # one-time prep, reused across calls

    out = jax.block_until_ready(eiie_rnn_forward(x, prepped))
    ref = jax.block_until_ready(reference_forward(x, params))

    assert out.shape == (B + 1,), out.shape
    # Exact softmax normalization (no approximate reciprocal).
    assert jnp.allclose(jnp.sum(out), 1.0, atol=1e-5)
    # bf16 matmul operands (f32 accumulation) vs. f32 reference.
    assert jnp.allclose(out, ref, atol=1e-2, rtol=1e-2), (out, ref)
    print("KERNEL_OK")
</pallas_src>

<mosaic_0001>
module attributes {stable_mosaic.version = 11 : i64} {
  func.func @kernel(%arg0: memref<2xf32, #tpu.memory_space<smem>>, %arg1: memref<64x32xbf16, #tpu.memory_space<vmem>>, %arg2: memref<4x32x32xbf16, #tpu.memory_space<vmem>>, %arg3: memref<3x32xf32, #tpu.memory_space<vmem>>, %arg4: memref<8x1xf32, #tpu.memory_space<vmem>>) attributes {dimension_semantics = [], scalar_prefetch = 0 : i64, scratch_operands = 0 : i64, tpu.core_type = #tpu.core_type<tc>} {
    %c0 = arith.constant 0 : index
    %c0_0 = arith.constant 0 : index
    %0 = vector.load %arg3[%c0, %c0_0] : memref<3x32xf32, #tpu.memory_space<vmem>>, vector<3x32xf32>
    %c0_1 = arith.constant 0 : index
    %1 = memref.load %arg0[%c0_1] : memref<2xf32, #tpu.memory_space<smem>>
    %c1 = arith.constant 1 : index
    %2 = memref.load %arg0[%c1] : memref<2xf32, #tpu.memory_space<smem>>
    %c0_2 = arith.constant 0 : index
    %c0_3 = arith.constant 0 : index
    %3 = vector.load %arg1[%c0_2, %c0_3] : memref<64x32xbf16, #tpu.memory_space<vmem>>, vector<64x32xbf16>
    %c0_4 = arith.constant 0 : index
    %c0_5 = arith.constant 0 : index
    %c0_6 = arith.constant 0 : index
    %4 = vector.load %arg2[%c0_4, %c0_5, %c0_6] : memref<4x32x32xbf16, #tpu.memory_space<vmem>>, vector<1x32x32xbf16>
    %5 = vector.shape_cast %4 : vector<1x32x32xbf16> to vector<32x32xbf16>
    %cst = arith.constant dense<0.000000e+00> : vector<64x32xf32>
    %6 = tpu.matmul %3, %5, %cst {dimension_numbers = #tpu.dot_dimension_numbers<[1], [0], [0], [1], [0, 0, 1, 1], [], []>} : vector<64x32xbf16>, vector<32x32xbf16>, vector<64x32xf32> -> vector<64x32xf32>
    %7 = vector.extract_strided_slice %0 {offsets = [0, 0], sizes = [1, 32], strides = [1, 1]} : vector<3x32xf32> to vector<1x32xf32>
    %8 = vector.broadcast %7 : vector<1x32xf32> to vector<64x32xf32>
    %9 = arith.addf %6, %8 : vector<64x32xf32>
    %c1_7 = arith.constant 1 : index
    %c0_8 = arith.constant 0 : index
    %c0_9 = arith.constant 0 : index
    %10 = vector.load %arg2[%c1_7, %c0_8, %c0_9] : memref<4x32x32xbf16, #tpu.memory_space<vmem>>, vector<1x32x32xbf16>
    %11 = vector.shape_cast %10 : vector<1x32x32xbf16> to vector<32x32xbf16>
    %c3 = arith.constant 3 : index
    %c0_10 = arith.constant 0 : index
    %c0_11 = arith.constant 0 : index
    %12 = vector.load %arg2[%c3, %c0_10, %c0_11] : memref<4x32x32xbf16, #tpu.memory_space<vmem>>, vector<1x32x32xbf16>
    %13 = vector.shape_cast %12 : vector<1x32x32xbf16> to vector<32x32xbf16>
    %c2 = arith.constant 2 : index
    %c0_12 = arith.constant 0 : index
    %c0_13 = arith.constant 0 : index
    %14 = vector.load %arg2[%c2, %c0_12, %c0_13] : memref<4x32x32xbf16, #tpu.memory_space<vmem>>, vector<1x32x32xbf16>
    %15 = vector.shape_cast %14 : vector<1x32x32xbf16> to vector<32x32xbf16>
    %16 = vector.extract_strided_slice %0 {offsets = [1, 0], sizes = [1, 32], strides = [1, 1]} : vector<3x32xf32> to vector<1x32xf32>
    %17 = vector.shape_cast %16 : vector<1x32xf32> to vector<1x32xf32>
    %18 = vector.broadcast %17 : vector<1x32xf32> to vector<8x32xf32>
    %cst_14 = arith.constant 0.000000e+00 : bf16
    %19 = vector.broadcast %cst_14 : bf16 to vector<8x32xbf16>
    %cst_15 = arith.constant 0.000000e+00 : bf16
    %20 = vector.broadcast %cst_15 : bf16 to vector<8x32xbf16>
    %21 = vector.extract_strided_slice %9 {offsets = [0, 0], sizes = [8, 32], strides = [1, 1]} : vector<64x32xf32> to vector<8x32xf32>
    %cst_16 = arith.constant dense<0.000000e+00> : vector<8x32xf32>
    %22 = tpu.matmul %19, %11, %cst_16 {dimension_numbers = #tpu.dot_dimension_numbers<[1], [0], [0], [1], [0, 0, 1, 1], [], []>} : vector<8x32xbf16>, vector<32x32xbf16>, vector<8x32xf32> -> vector<8x32xf32>
    %23 = arith.addf %21, %22 : vector<8x32xf32>
    %24 = math.tanh %23 : vector<8x32xf32>
    %25 = arith.truncf %24 : vector<8x32xf32> to vector<8x32xbf16>
    %cst_17 = arith.constant dense<0.000000e+00> : vector<8x32xf32>
    %26 = tpu.matmul %25, %15, %cst_17 {dimension_numbers = #tpu.dot_dimension_numbers<[1], [0], [0], [1], [0, 0, 1, 1], [], []>} : vector<8x32xbf16>, vector<32x32xbf16>, vector<8x32xf32> -> vector<8x32xf32>
    %cst_18 = arith.constant dense<0.000000e+00> : vector<8x32xf32>
    %27 = tpu.matmul %20, %13, %cst_18 {dimension_numbers = #tpu.dot_dimension_numbers<[1], [0], [0], [1], [0, 0, 1, 1], [], []>} : vector<8x32xbf16>, vector<32x32xbf16>, vector<8x32xf32> -> vector<8x32xf32>
    %28 = arith.addf %26, %27 : vector<8x32xf32>
    %29 = arith.addf %28, %18 : vector<8x32xf32>
    %30 = math.tanh %29 : vector<8x32xf32>
    %31 = arith.truncf %30 : vector<8x32xf32> to vector<8x32xbf16>
    %32 = vector.extract_strided_slice %9 {offsets = [8, 0], sizes = [8, 32], strides = [1, 1]} : vector<64x32xf32> to vector<8x32xf32>
    %cst_19 = arith.constant dense<0.000000e+00> : vector<8x32xf32>
    %33 = tpu.matmul %25, %11, %cst_19 {dimension_numbers = #tpu.dot_dimension_numbers<[1], [0], [0], [1], [0, 0, 1, 1], [], []>} : vector<8x32xbf16>, vector<32x32xbf16>, vector<8x32xf32> -> vector<8x32xf32>
    %34 = arith.addf %32, %33 : vector<8x32xf32>
    %35 = math.tanh %34 : vector<8x32xf32>
    %36 = arith.truncf %35 : vector<8x32xf32> to vector<8x32xbf16>
    %cst_20 = arith.constant dense<0.000000e+00> : vector<8x32xf32>
    %37 = tpu.matmul %36, %15, %cst_20 {dimension_numbers = #tpu.dot_dimension_numbers<[1], [0], [0], [1], [0, 0, 1, 1], [], []>} : vector<8x32xbf16>, vector<32x32xbf16>, vector<8x32xf32> -> vector<8x32xf32>
    %cst_21 = arith.constant dense<0.000000e+00> : vector<8x32xf32>
    %38 = tpu.matmul %31, %13, %cst_21 {dimension_numbers = #tpu.dot_dimension_numbers<[1], [0], [0], [1], [0, 0, 1, 1], [], []>} : vector<8x32xbf16>, vector<32x32xbf16>, vector<8x32xf32> -> vector<8x32xf32>
    %39 = arith.addf %37, %38 : vector<8x32xf32>
    %40 = arith.addf %39, %18 : vector<8x32xf32>
    %41 = math.tanh %40 : vector<8x32xf32>
    %42 = arith.truncf %41 : vector<8x32xf32> to vector<8x32xbf16>
    %43 = vector.extract_strided_slice %9 {offsets = [16, 0], sizes = [8, 32], strides = [1, 1]} : vector<64x32xf32> to vector<8x32xf32>
    %cst_22 = arith.constant dense<0.000000e+00> : vector<8x32xf32>
    %44 = tpu.matmul %36, %11, %cst_22 {dimension_numbers = #tpu.dot_dimension_numbers<[1], [0], [0], [1], [0, 0, 1, 1], [], []>} : vector<8x32xbf16>, vector<32x32xbf16>, vector<8x32xf32> -> vector<8x32xf32>
    %45 = arith.addf %43, %44 : vector<8x32xf32>
    %46 = math.tanh %45 : vector<8x32xf32>
    %47 = arith.truncf %46 : vector<8x32xf32> to vector<8x32xbf16>
    %cst_23 = arith.constant dense<0.000000e+00> : vector<8x32xf32>
    %48 = tpu.matmul %47, %15, %cst_23 {dimension_numbers = #tpu.dot_dimension_numbers<[1], [0], [0], [1], [0, 0, 1, 1], [], []>} : vector<8x32xbf16>, vector<32x32xbf16>, vector<8x32xf32> -> vector<8x32xf32>
    %cst_24 = arith.constant dense<0.000000e+00> : vector<8x32xf32>
    %49 = tpu.matmul %42, %13, %cst_24 {dimension_numbers = #tpu.dot_dimension_numbers<[1], [0], [0], [1], [0, 0, 1, 1], [], []>} : vector<8x32xbf16>, vector<32x32xbf16>, vector<8x32xf32> -> vector<8x32xf32>
    %50 = arith.addf %48, %49 : vector<8x32xf32>
    %51 = arith.addf %50, %18 : vector<8x32xf32>
    %52 = math.tanh %51 : vector<8x32xf32>
    %53 = arith.truncf %52 : vector<8x32xf32> to vector<8x32xbf16>
    %54 = vector.extract_strided_slice %9 {offsets = [24, 0], sizes = [8, 32], strides = [1, 1]} : vector<64x32xf32> to vector<8x32xf32>
    %cst_25 = arith.constant dense<0.000000e+00> : vector<8x32xf32>
    %55 = tpu.matmul %47, %11, %cst_25 {dimension_numbers = #tpu.dot_dimension_numbers<[1], [0], [0], [1], [0, 0, 1, 1], [], []>} : vector<8x32xbf16>, vector<32x32xbf16>, vector<8x32xf32> -> vector<8x32xf32>
    %56 = arith.addf %54, %55 : vector<8x32xf32>
    %57 = math.tanh %56 : vector<8x32xf32>
    %58 = arith.truncf %57 : vector<8x32xf32> to vector<8x32xbf16>
    %cst_26 = arith.constant dense<0.000000e+00> : vector<8x32xf32>
    %59 = tpu.matmul %58, %15, %cst_26 {dimension_numbers = #tpu.dot_dimension_numbers<[1], [0], [0], [1], [0, 0, 1, 1], [], []>} : vector<8x32xbf16>, vector<32x32xbf16>, vector<8x32xf32> -> vector<8x32xf32>
    %cst_27 = arith.constant dense<0.000000e+00> : vector<8x32xf32>
    %60 = tpu.matmul %53, %13, %cst_27 {dimension_numbers = #tpu.dot_dimension_numbers<[1], [0], [0], [1], [0, 0, 1, 1], [], []>} : vector<8x32xbf16>, vector<32x32xbf16>, vector<8x32xf32> -> vector<8x32xf32>
    %61 = arith.addf %59, %60 : vector<8x32xf32>
    %62 = arith.addf %61, %18 : vector<8x32xf32>
    %63 = math.tanh %62 : vector<8x32xf32>
    %64 = arith.truncf %63 : vector<8x32xf32> to vector<8x32xbf16>
    %65 = vector.extract_strided_slice %9 {offsets = [32, 0], sizes = [8, 32], strides = [1, 1]} : vector<64x32xf32> to vector<8x32xf32>
    %cst_28 = arith.constant dense<0.000000e+00> : vector<8x32xf32>
    %66 = tpu.matmul %58, %11, %cst_28 {dimension_numbers = #tpu.dot_dimension_numbers<[1], [0], [0], [1], [0, 0, 1, 1], [], []>} : vector<8x32xbf16>, vector<32x32xbf16>, vector<8x32xf32> -> vector<8x32xf32>
    %67 = arith.addf %65, %66 : vector<8x32xf32>
    %68 = math.tanh %67 : vector<8x32xf32>
    %69 = arith.truncf %68 : vector<8x32xf32> to vector<8x32xbf16>
    %cst_29 = arith.constant dense<0.000000e+00> : vector<8x32xf32>
    %70 = tpu.matmul %69, %15, %cst_29 {dimension_numbers = #tpu.dot_dimension_numbers<[1], [0], [0], [1], [0, 0, 1, 1], [], []>} : vector<8x32xbf16>, vector<32x32xbf16>, vector<8x32xf32> -> vector<8x32xf32>
    %cst_30 = arith.constant dense<0.000000e+00> : vector<8x32xf32>
    %71 = tpu.matmul %64, %13, %cst_30 {dimension_numbers = #tpu.dot_dimension_numbers<[1], [0], [0], [1], [0, 0, 1, 1], [], []>} : vector<8x32xbf16>, vector<32x32xbf16>, vector<8x32xf32> -> vector<8x32xf32>
    %72 = arith.addf %70, %71 : vector<8x32xf32>
    %73 = arith.addf %72, %18 : vector<8x32xf32>
    %74 = math.tanh %73 : vector<8x32xf32>
    %75 = arith.truncf %74 : vector<8x32xf32> to vector<8x32xbf16>
    %76 = vector.extract_strided_slice %9 {offsets = [40, 0], sizes = [8, 32], strides = [1, 1]} : vector<64x32xf32> to vector<8x32xf32>
    %cst_31 = arith.constant dense<0.000000e+00> : vector<8x32xf32>
    %77 = tpu.matmul %69, %11, %cst_31 {dimension_numbers = #tpu.dot_dimension_numbers<[1], [0], [0], [1], [0, 0, 1, 1], [], []>} : vector<8x32xbf16>, vector<32x32xbf16>, vector<8x32xf32> -> vector<8x32xf32>
    %78 = arith.addf %76, %77 : vector<8x32xf32>
    %79 = math.tanh %78 : vector<8x32xf32>
    %80 = arith.truncf %79 : vector<8x32xf32> to vector<8x32xbf16>
    %cst_32 = arith.constant dense<0.000000e+00> : vector<8x32xf32>
    %81 = tpu.matmul %80, %15, %cst_32 {dimension_numbers = #tpu.dot_dimension_numbers<[1], [0], [0], [1], [0, 0, 1, 1], [], []>} : vector<8x32xbf16>, vector<32x32xbf16>, vector<8x32xf32> -> vector<8x32xf32>
    %cst_33 = arith.constant dense<0.000000e+00> : vector<8x32xf32>
    %82 = tpu.matmul %75, %13, %cst_33 {dimension_numbers = #tpu.dot_dimension_numbers<[1], [0], [0], [1], [0, 0, 1, 1], [], []>} : vector<8x32xbf16>, vector<32x32xbf16>, vector<8x32xf32> -> vector<8x32xf32>
    %83 = arith.addf %81, %82 : vector<8x32xf32>
    %84 = arith.addf %83, %18 : vector<8x32xf32>
    %85 = math.tanh %84 : vector<8x32xf32>
    %86 = arith.truncf %85 : vector<8x32xf32> to vector<8x32xbf16>
    %87 = vector.extract_strided_slice %9 {offsets = [48, 0], sizes = [8, 32], strides = [1, 1]} : vector<64x32xf32> to vector<8x32xf32>
    %cst_34 = arith.constant dense<0.000000e+00> : vector<8x32xf32>
    %88 = tpu.matmul %80, %11, %cst_34 {dimension_numbers = #tpu.dot_dimension_numbers<[1], [0], [0], [1], [0, 0, 1, 1], [], []>} : vector<8x32xbf16>, vector<32x32xbf16>, vector<8x32xf32> -> vector<8x32xf32>
    %89 = arith.addf %87, %88 : vector<8x32xf32>
    %90 = math.tanh %89 : vector<8x32xf32>
    %91 = arith.truncf %90 : vector<8x32xf32> to vector<8x32xbf16>
    %cst_35 = arith.constant dense<0.000000e+00> : vector<8x32xf32>
    %92 = tpu.matmul %91, %15, %cst_35 {dimension_numbers = #tpu.dot_dimension_numbers<[1], [0], [0], [1], [0, 0, 1, 1], [], []>} : vector<8x32xbf16>, vector<32x32xbf16>, vector<8x32xf32> -> vector<8x32xf32>
    %cst_36 = arith.constant dense<0.000000e+00> : vector<8x32xf32>
    %93 = tpu.matmul %86, %13, %cst_36 {dimension_numbers = #tpu.dot_dimension_numbers<[1], [0], [0], [1], [0, 0, 1, 1], [], []>} : vector<8x32xbf16>, vector<32x32xbf16>, vector<8x32xf32> -> vector<8x32xf32>
    %94 = arith.addf %92, %93 : vector<8x32xf32>
    %95 = arith.addf %94, %18 : vector<8x32xf32>
    %96 = math.tanh %95 : vector<8x32xf32>
    %97 = arith.truncf %96 : vector<8x32xf32> to vector<8x32xbf16>
    %98 = vector.extract_strided_slice %9 {offsets = [56, 0], sizes = [8, 32], strides = [1, 1]} : vector<64x32xf32> to vector<8x32xf32>
    %cst_37 = arith.constant dense<0.000000e+00> : vector<8x32xf32>
    %99 = tpu.matmul %91, %11, %cst_37 {dimension_numbers = #tpu.dot_dimension_numbers<[1], [0], [0], [1], [0, 0, 1, 1], [], []>} : vector<8x32xbf16>, vector<32x32xbf16>, vector<8x32xf32> -> vector<8x32xf32>
    %100 = arith.addf %98, %99 : vector<8x32xf32>
    %101 = math.tanh %100 : vector<8x32xf32>
    %102 = arith.truncf %101 : vector<8x32xf32> to vector<8x32xbf16>
    %cst_38 = arith.constant dense<0.000000e+00> : vector<8x32xf32>
    %103 = tpu.matmul %102, %15, %cst_38 {dimension_numbers = #tpu.dot_dimension_numbers<[1], [0], [0], [1], [0, 0, 1, 1], [], []>} : vector<8x32xbf16>, vector<32x32xbf16>, vector<8x32xf32> -> vector<8x32xf32>
    %cst_39 = arith.constant dense<0.000000e+00> : vector<8x32xf32>
    %104 = tpu.matmul %97, %13, %cst_39 {dimension_numbers = #tpu.dot_dimension_numbers<[1], [0], [0], [1], [0, 0, 1, 1], [], []>} : vector<8x32xbf16>, vector<32x32xbf16>, vector<8x32xf32> -> vector<8x32xf32>
    %105 = arith.addf %103, %104 : vector<8x32xf32>
    %106 = arith.addf %105, %18 : vector<8x32xf32>
    %107 = math.tanh %106 : vector<8x32xf32>
    %108 = arith.truncf %107 : vector<8x32xf32> to vector<8x32xbf16>
    %109 = arith.extf %108 : vector<8x32xbf16> to vector<8x32xf32>
    %110 = vector.extract_strided_slice %0 {offsets = [2, 0], sizes = [1, 32], strides = [1, 1]} : vector<3x32xf32> to vector<1x32xf32>
    %111 = vector.broadcast %110 : vector<1x32xf32> to vector<8x32xf32>
    %112 = arith.mulf %109, %111 : vector<8x32xf32>
    %cst_40 = arith.constant dense<0.000000e+00> : vector<8xf32>
    %113 = vector.multi_reduction <add>, %112, %cst_40 [1] : vector<8x32xf32> to vector<8xf32>
    %114 = vector.shape_cast %113 : vector<8xf32> to vector<8x1xf32>
    %115 = vector.broadcast %1 : f32 to vector<8x1xf32>
    %116 = arith.addf %114, %115 : vector<8x1xf32>
    %117 = tpu.iota {dimensions = array<i32: 0>} : vector<8x1xi32>
    %c4_i32 = arith.constant 4 : i32
    %118 = vector.broadcast %c4_i32 : i32 to vector<8x1xi32>
    %119 = arith.cmpi sle, %117, %118 : vector<8x1xi32>
    %c4_i32_41 = arith.constant 4 : i32
    %120 = vector.broadcast %c4_i32_41 : i32 to vector<8x1xi32>
    %121 = arith.cmpi eq, %117, %120 : vector<8x1xi32>
    %122 = vector.broadcast %2 : f32 to vector<8x1xf32>
    %123 = arith.select %121, %122, %116 : vector<8x1xi1>, vector<8x1xf32>
    %cst_42 = arith.constant -1.000000e+30 : f32
    %124 = vector.broadcast %cst_42 : f32 to vector<8x1xf32>
    %125 = arith.select %119, %123, %124 : vector<8x1xi1>, vector<8x1xf32>
    %cst_43 = arith.constant dense<0xFF800000> : vector<1xf32>
    %126 = vector.multi_reduction <maximumf>, %125, %cst_43 [0] : vector<8x1xf32> to vector<1xf32>
    %127 = vector.shape_cast %126 : vector<1xf32> to vector<1x1xf32>
    %128 = vector.broadcast %127 : vector<1x1xf32> to vector<8x1xf32>
    %129 = arith.subf %123, %128 : vector<8x1xf32>
    %130 = math.exp %129 : vector<8x1xf32>
    %cst_44 = arith.constant 0.000000e+00 : f32
    %131 = vector.broadcast %cst_44 : f32 to vector<8x1xf32>
    %132 = arith.select %119, %130, %131 : vector<8x1xi1>, vector<8x1xf32>
    %cst_45 = arith.constant dense<0.000000e+00> : vector<1xf32>
    %133 = vector.multi_reduction <add>, %132, %cst_45 [0] : vector<8x1xf32> to vector<1xf32>
    %134 = vector.shape_cast %133 : vector<1xf32> to vector<1x1xf32>
    %135 = vector.broadcast %134 : vector<1x1xf32> to vector<8x1xf32>
    %136 = arith.divf %132, %135 : vector<8x1xf32>
    %c0_46 = arith.constant 0 : index
    %c0_47 = arith.constant 0 : index
    %137 = vector.load %arg4[%c0_46, %c0_47] : memref<8x1xf32, #tpu.memory_space<vmem>>, vector<8x1xf32>
    tpu.vector_store %arg4[%c0_46, %c0_47], %136 {strides = array<i32>} : memref<8x1xf32, #tpu.memory_space<vmem>>, vector<8x1xf32>,
    return
  }
}

</mosaic_0001>

<llo_original>
// kernel: eiie_rnn_forward.1
$region0: #{eiie_rnn_forward.1}
  #allocation0 [shape = 'u32[]', space=smem, size = 0x4, offset = 0x4, fixed_abs, tag = 'smem constant byte address 0x4 - core index']
  #allocation1 [shape = 'u32[144,128]{1,0:T(1,128)}', space=vmem, size = 0x12000, scoped, tag = 'internal scratch']
  %s0 = inlined_call_operand.vmem [shape: f32[2], index: 0, kind: input, shape index: {}]
  %s1 = inlined_call_operand.vmem [shape: bf16[64,32], index: 1, kind: input, shape index: {}]
  %s2 = inlined_call_operand.vmem [shape: bf16[4,32,32], index: 2, kind: input, shape index: {}]
  %s3 = inlined_call_operand.vmem [shape: f32[3,32], index: 3, kind: input, shape index: {}]
  %s4 = inlined_call_operand.vmem [shape: f32[8,1], index: 4, kind: output, shape index: {}]
  %s5 = sld [smem:[#allocation0]]
  $region30: #{eiie_rnn_forward.1} parent=0
    _
  %s7 = ssub.s32 1, %s5
  %s8 = scalar_select 0, %s7, %s5
  $region1: #{eiie_rnn_forward.1} parent=0
    #allocation2 [shape = 'u8[512]{0}', space=smem, size = 0x200, scoped, tag = 'input window, operand 0, single buffered']
    #allocation3 [shape = 's32[1]{0}', space=sflag, size = 0x4, scoped, tag = 'scoped memory for eiie_rnn_forward.1']
    %9 = vsyncpa [#allocation3], 0
    // Predicated region
    $region2: #{eiie_rnn_forward.1} parent=1 // pred_check
      _
    $region3: #{eiie_rnn_forward.1} parent=1 // pred_check_branch
      %11 = sbr.rel (0) target = $region5
    $region4: #{eiie_rnn_forward.1} parent=1 // pred_region
      %s13 = ssub.s32 16, 16
      %14 = vsyncadd [#allocation3], %s13
      %s16 = sshll.u32 %s0, 4
      %s17 = int_to_ptr.vmem [resolvable:$true] %s16
      %19 = dma.vmem_to_smem %s17, 16, [#allocation2], [#allocation3]
    $region5: #{eiie_rnn_forward.1} parent=1 // pred_fallthru
      _
    // Predicated region
    $region6: #{eiie_rnn_forward.1} parent=1 // pred_check
      _
    $region7: #{eiie_rnn_forward.1} parent=1 // pred_check_branch
      %21 = sbr.rel (0) target = $region9
    $region8: #{eiie_rnn_forward.1} parent=1 // pred_region
      _
    $region9: #{eiie_rnn_forward.1} parent=1 // pred_fallthru
      _
    // Predicated region
    $region10: #{eiie_rnn_forward.1} parent=1 // pred_check
      _
    $region11: #{eiie_rnn_forward.1} parent=1 // pred_check_branch
      %23 = sbr.rel (0) target = $region13
    $region12: #{eiie_rnn_forward.1} parent=1 // pred_region
      _
    $region13: #{eiie_rnn_forward.1} parent=1 // pred_fallthru
      _
    // Predicated region
    $region14: #{eiie_rnn_forward.1} parent=1 // pred_check
      _
    $region15: #{eiie_rnn_forward.1} parent=1 // pred_check_branch
      %25 = sbr.rel (0) target = $region17
    $region16: #{eiie_rnn_forward.1} parent=1 // pred_region
      _
    $region17: #{eiie_rnn_forward.1} parent=1 // pred_fallthru
      _
    // Predicated region
    $region18: #{eiie_rnn_forward.1} parent=1 // pred_check
      _
    $region19: #{eiie_rnn_forward.1} parent=1 // pred_check_branch
      %27 = sbr.rel (0) target = $region21
    $region20: #{eiie_rnn_forward.1} parent=1 // pred_region
      %28 = dma.done [#allocation3], 16
    $region21: #{eiie_rnn_forward.1} parent=1 // pred_fallthru
      _
    %29 = sfence
    %v31 = vld [vmem:[%s3] sm:$0x7]
    %s32 = sld [smem:[#allocation2]]
    %s33 = sld [smem:[#allocation2 + $0x1]]
    %v34 = vld [vmem:[%s1] sm:$0xf]
    %v35 = vld [vmem:[%s1 + $0x4] sm:$0xf]
    %v36 = vld [vmem:[%s1 + $0x8] sm:$0xf]
    %v37 = vld [vmem:[%s1 + $0xc] sm:$0xf]
    %v38 = vld [vmem:[%s1 + $0x10] sm:$0xf]
    %v39 = vld [vmem:[%s1 + $0x14] sm:$0xf]
    %v40 = vld [vmem:[%s1 + $0x18] sm:$0xf]
    %v41 = vld [vmem:[%s1 + $0x1c] sm:$0xf]
    %v42 = vld [vmem:[%s2] sm:$0xf]
    %v43 = vld [vmem:[%s2 + $0x4] sm:$0xf]
    %v44 = vld [vmem:[%s2 + $0x8] sm:$0xf]
    %v45 = vld [vmem:[%s2 + $0xc] sm:$0xf]
    %v46 = vlaneseq
    %v47 = vshrl.u32 %v46, 7
    %v48 = vsub.s32 0, %v47
    %v49 = vrot.slane %v31, %v48
    %v58 = vunpack.c.l.b16 %v34
    %v59 = vunpack.c.l.b16 %v35
    %v60 = vunpack.c.l.b16 %v36
    %v61 = vunpack.c.l.b16 %v37
    %v62 = vunpack.c.l.b16 %v38
    %v63 = vunpack.c.l.b16 %v39
    %v64 = vunpack.c.l.b16 %v40
    %v65 = vunpack.c.l.b16 %v41
    %v66 = vpack.c.b16 %v59, %v58
    %v67 = vpack.c.b16 %v61, %v60
    %v68 = vpack.c.b16 %v63, %v62
    %v69 = vpack.c.b16 %v65, %v64
    %v74 = vunpack.c.l.b16 %v42
    %v75 = vunpack.c.l.b16 %v43
    %v76 = vunpack.c.l.b16 %v44
    %v77 = vunpack.c.l.b16 %v45
    %v78 = vpack.c.b16 %v75, %v74
    %v79 = vpack.c.b16 %v77, %v76
    %vm82 = vcmask 261120
    %v84 = vsel %vm82, %v66, 0
    %v87 = vsel %vm82, %v67, 0
    %v90 = vsel %vm82, %v68, 0
    %v93 = vsel %vm82, %v69, 0
    %95 = vmatprep.subr.bf16.mxu0 0
    %96 = vmatpush1.bf16.msra.mxu0 %v78
    %97 = vmatprep.subr.bf16.mxu0 0
    %98 = vmatpush1.bf16.msra.mxu0 %v79
    %99 = vmatprep.subr.bf16.mxu0 0
    %100 = vmatpush1.bf16.msra.mxu0 0
    %101 = vmatprep.subr.bf16.mxu0 0
    %102 = vmatpush1.bf16.msra.mxu0 0
    %103 = vmatprep.subr.bf16.mxu0 0
    %104 = vmatpush1.bf16.msra.mxu0 0
    %105 = vmatprep.subr.bf16.mxu0 0
    %106 = vmatpush1.bf16.msra.mxu0 0
    %107 = vmatprep.subr.bf16.mxu0 0
    %108 = vmatpush1.bf16.msra.mxu0 0
    %109 = vmatprep.subr.bf16.mxu0 0
    %110 = vmatpush1.bf16.msra.mxu0 0
    %111 = vmatprep.subr.bf16.mxu0 0
    %112 = vmatpush1.bf16.msra.mxu0 0
    %113 = vmatprep.subr.bf16.mxu0 0
    %114 = vmatpush1.bf16.msra.mxu0 0
    %115 = vmatprep.subr.bf16.mxu0 0
    %116 = vmatpush1.bf16.msra.mxu0 0
    %117 = vmatprep.subr.bf16.mxu0 0
    %118 = vmatpush1.bf16.msra.mxu0 0
    %119 = vmatprep.subr.bf16.mxu0 0
    %120 = vmatpush1.bf16.msra.mxu0 0
    %121 = vmatprep.subr.bf16.mxu0 0
    %122 = vmatpush1.bf16.msra.mxu0 0
    %123 = vmatprep.subr.bf16.mxu0 0
    %124 = vmatpush1.bf16.msra.mxu0 0
    %125 = vmatprep.subr.bf16.mxu0 0
    %126 = vmatpush1.bf16.msra.mxu0 0
    %127 = vmatprep.mubr.bf16.mxu0 0
    %128 = vmatmul.mubr.bf16.gmra.mrb[0].mxu0 %v84
    %v129 = vpop.f32.mrb[0].mxu0
    %v130 = vadd.f32 %v49, %v129
    %v131 = vpop.f32.mrb[0].mxu0
    %v132 = vpop.f32.mrb[0].mxu0
    %v133 = vadd.f32 %v49, %v132
    %v134 = vpop.f32.mrb[0].mxu0
    %135 = vmatprep.mubr.bf16.mxu0 0
    %136 = vmatmul.mubr.bf16.gmra.mrb[0].mxu0 %v87
    %v137 = vpop.f32.mrb[0].mxu0
    %v138 = vadd.f32 %v49, %v137
    %v139 = vpop.f32.mrb[0].mxu0
    %v140 = vpop.f32.mrb[0].mxu0
    %v141 = vadd.f32 %v49, %v140
    %v142 = vpop.f32.mrb[0].mxu0
    %143 = vmatprep.mubr.bf16.mxu0 0
    %144 = vmatmul.mubr.bf16.gmra.mrb[0].mxu0 %v90
    %v145 = vpop.f32.mrb[0].mxu0
    %v146 = vadd.f32 %v49, %v145
    %v147 = vpop.f32.mrb[0].mxu0
    %v148 = vpop.f32.mrb[0].mxu0
    %v149 = vadd.f32 %v49, %v148
    %v150 = vpop.f32.mrb[0].mxu0
    %151 = vmatprep.mubr.bf16.mxu0 0
    %152 = vmatmul.mubr.bf16.gmra.mrb[0].mxu0 %v93
    %v153 = vpop.f32.mrb[0].mxu0
    %v154 = vadd.f32 %v49, %v153
    %v155 = vpop.f32.mrb[0].mxu0
    %v156 = vpop.f32.mrb[0].mxu0
    %v157 = vadd.f32 %v49, %v156
    %v158 = vpop.f32.mrb[0].mxu0
    %159 = vdwg.mxu0
    %s160 = scalar_lea.vmem %s2, 16
    %v161 = vld [vmem:[%s160] sm:$0xf]
    %v162 = vld [vmem:[%s160 + $0x4] sm:$0xf]
    %v163 = vld [vmem:[%s160 + $0x8] sm:$0xf]
    %v164 = vld [vmem:[%s160 + $0xc] sm:$0xf]
    %s165 = scalar_lea.vmem %s2, 48
    %v166 = vld [vmem:[%s165] sm:$0xf]
    %v167 = vld [vmem:[%s165 + $0x4] sm:$0xf]
    %v168 = vld [vmem:[%s165 + $0x8] sm:$0xf]
    %v169 = vld [vmem:[%s165 + $0xc] sm:$0xf]
    %s170 = scalar_lea.vmem %s2, 32
    %v171 = vld [vmem:[%s170] sm:$0xf]
    %v172 = vld [vmem:[%s170 + $0x4] sm:$0xf]
    %v173 = vld [vmem:[%s170 + $0x8] sm:$0xf]
    %v174 = vld [vmem:[%s170 + $0xc] sm:$0xf]
    %v175 = vlaneseq
    %v176 = vshrl.u32 %v175, 7
    %v177 = vsub.s32 1, %v176
    %v178 = vrot.slane %v31, %v177
    %v183 = vunpack.c.l.b16 %v161
    %v184 = vunpack.c.l.b16 %v162
    %v185 = vunpack.c.l.b16 %v163
    %v186 = vunpack.c.l.b16 %v164
    %v187 = vpack.c.b16 %v184, %v183
    %v188 = vpack.c.b16 %v186, %v185
    %v192 = vsel %vm82, 0, 0
    %194 = vmatprep.subr.bf16.mxu0 0
    %195 = vmatpush1.bf16.msra.mxu0 %v187
    %196 = vmatprep.subr.bf16.mxu0 0
    %197 = vmatpush1.bf16.msra.mxu0 %v188
    %198 = vmatprep.subr.bf16.mxu0 0
    %199 = vmatpush1.bf16.msra.mxu0 0
    %200 = vmatprep.subr.bf16.mxu0 0
    %201 = vmatpush1.bf16.msra.mxu0 0
    %202 = vmatprep.subr.bf16.mxu0 0
    %203 = vmatpush1.bf16.msra.mxu0 0
    %204 = vmatprep.subr.bf16.mxu0 0
    %205 = vmatpush1.bf16.msra.mxu0 0
    %206 = vmatprep.subr.bf16.mxu0 0
    %207 = vmatpush1.bf16.msra.mxu0 0
    %208 = vmatprep.subr.bf16.mxu0 0
    %209 = vmatpush1.bf16.msra.mxu0 0
    %210 = vmatprep.subr.bf16.mxu0 0
    %211 = vmatpush1.bf16.msra.mxu0 0
    %212 = vmatprep.subr.bf16.mxu0 0
    %213 = vmatpush1.bf16.msra.mxu0 0
    %214 = vmatprep.subr.bf16.mxu0 0
    %215 = vmatpush1.bf16.msra.mxu0 0
    %216 = vmatprep.subr.bf16.mxu0 0
    %217 = vmatpush1.bf16.msra.mxu0 0
    %218 = vmatprep.subr.bf16.mxu0 0
    %219 = vmatpush1.bf16.msra.mxu0 0
    %220 = vmatprep.subr.bf16.mxu0 0
    %221 = vmatpush1.bf16.msra.mxu0 0
    %222 = vmatprep.subr.bf16.mxu0 0
    %223 = vmatpush1.bf16.msra.mxu0 0
    %224 = vmatprep.subr.bf16.mxu0 0
    %225 = vmatpush1.bf16.msra.mxu0 0
    %226 = vmatprep.mubr.bf16.mxu0 0
    %227 = vmatmul.mubr.bf16.gmra.mrb[0].mxu0 %v192
    %v228 = vpop.f32.mrb[0].mxu0
    %v229 = vadd.f32 0.0, %v228
    %v230 = vpop.f32.mrb[0].mxu0
    %v231 = vpop.f32.mrb[0].mxu0
    %v232 = vpop.f32.mrb[0].mxu0
    %233 = vdwg.mxu0
    %v234 = vadd.f32 %v130, %v229
    %v235 = vtanh.pop %v234
    %v236 = vpack.c.bf16 %v235, %v235
    %v241 = vunpack.c.l.b16 %v166
    %v242 = vunpack.c.l.b16 %v167
    %v243 = vunpack.c.l.b16 %v168
    %v244 = vunpack.c.l.b16 %v169
    %v245 = vpack.c.b16 %v242, %v241
    %v246 = vpack.c.b16 %v244, %v243
    %249 = vmatprep.subr.bf16.mxu0 0
    %250 = vmatpush1.bf16.msra.mxu0 %v245
    %251 = vmatprep.subr.bf16.mxu0 0
    %252 = vmatpush1.bf16.msra.mxu0 %v246
    %253 = vmatprep.subr.bf16.mxu0 0
    %254 = vmatpush1.bf16.msra.mxu0 0
    %255 = vmatprep.subr.bf16.mxu0 0
    %256 = vmatpush1.bf16.msra.mxu0 0
    %257 = vmatprep.subr.bf16.mxu0 0
    %258 = vmatpush1.bf16.msra.mxu0 0
    %259 = vmatprep.subr.bf16.mxu0 0
    %260 = vmatpush1.bf16.msra.mxu0 0
    %261 = vmatprep.subr.bf16.mxu0 0
    %262 = vmatpush1.bf16.msra.mxu0 0
    %263 = vmatprep.subr.bf16.mxu0 0
    %264 = vmatpush1.bf16.msra.mxu0 0
    %265 = vmatprep.subr.bf16.mxu0 0
    %266 = vmatpush1.bf16.msra.mxu0 0
    %267 = vmatprep.subr.bf16.mxu0 0
    %268 = vmatpush1.bf16.msra.mxu0 0
    %269 = vmatprep.subr.bf16.mxu0 0
    %270 = vmatpush1.bf16.msra.mxu0 0
    %271 = vmatprep.subr.bf16.mxu0 0
    %272 = vmatpush1.bf16.msra.mxu0 0
    %273 = vmatprep.subr.bf16.mxu0 0
    %274 = vmatpush1.bf16.msra.mxu0 0
    %275 = vmatprep.subr.bf16.mxu0 0
    %276 = vmatpush1.bf16.msra.mxu0 0
    %277 = vmatprep.subr.bf16.mxu0 0
    %278 = vmatpush1.bf16.msra.mxu0 0
    %279 = vmatprep.subr.bf16.mxu0 0
    %280 = vmatpush1.bf16.msra.mxu0 0
    %281 = vmatprep.mubr.bf16.mxu0 0
    %282 = vmatmul.mubr.bf16.gmra.mrb[0].mxu0 %v192
    %v283 = vpop.f32.mrb[0].mxu0
    %v284 = vadd.f32 0.0, %v283
    %v285 = vpop.f32.mrb[0].mxu0
    %v286 = vpop.f32.mrb[0].mxu0
    %v287 = vpop.f32.mrb[0].mxu0
    %288 = vdwg.mxu0
    %v293 = vunpack.c.l.b16 %v171
    %v294 = vunpack.c.l.b16 %v172
    %v295 = vunpack.c.l.b16 %v173
    %v296 = vunpack.c.l.b16 %v174
    %v297 = vpack.c.b16 %v294, %v293
    %v298 = vpack.c.b16 %v296, %v295
    %v302 = vsel %vm82, %v236, 0
    %304 = vmatprep.subr.bf16.mxu0 0
    %305 = vmatpush1.bf16.msra.mxu0 %v297
    %306 = vmatprep.subr.bf16.mxu0 0
    %307 = vmatpush1.bf16.msra.mxu0 %v298
    %308 = vmatprep.subr.bf16.mxu0 0
    %309 = vmatpush1.bf16.msra.mxu0 0
    %310 = vmatprep.subr.bf16.mxu0 0
    %311 = vmatpush1.bf16.msra.mxu0 0
    %312 = vmatprep.subr.bf16.mxu0 0
    %313 = vmatpush1.bf16.msra.mxu0 0
    %314 = vmatprep.subr.bf16.mxu0 0
    %315 = vmatpush1.bf16.msra.mxu0 0
    %316 = vmatprep.subr.bf16.mxu0 0
    %317 = vmatpush1.bf16.msra.mxu0 0
    %318 = vmatprep.subr.bf16.mxu0 0
    %319 = vmatpush1.bf16.msra.mxu0 0
    %320 = vmatprep.subr.bf16.mxu0 0
    %321 = vmatpush1.bf16.msra.mxu0 0
    %322 = vmatprep.subr.bf16.mxu0 0
    %323 = vmatpush1.bf16.msra.mxu0 0
    %324 = vmatprep.subr.bf16.mxu0 0
    %325 = vmatpush1.bf16.msra.mxu0 0
    %326 = vmatprep.subr.bf16.mxu0 0
    %327 = vmatpush1.bf16.msra.mxu0 0
    %328 = vmatprep.subr.bf16.mxu0 0
    %329 = vmatpush1.bf16.msra.mxu0 0
    %330 = vmatprep.subr.bf16.mxu0 0
    %331 = vmatpush1.bf16.msra.mxu0 0
    %332 = vmatprep.subr.bf16.mxu0 0
    %333 = vmatpush1.bf16.msra.mxu0 0
    %334 = vmatprep.subr.bf16.mxu0 0
    %335 = vmatpush1.bf16.msra.mxu0 0
    %336 = vmatprep.mubr.bf16.mxu0 0
    %337 = vmatmul.mubr.bf16.gmra.mrb[0].mxu0 %v302
    %v338 = vpop.f32.mrb[0].mxu0
    %v339 = vadd.f32 %v284, %v338
    %v340 = vpop.f32.mrb[0].mxu0
    %v341 = vpop.f32.mrb[0].mxu0
    %v342 = vpop.f32.mrb[0].mxu0
    %343 = vdwg.mxu0
    %v344 = vadd.f32 %v339, %v178
    %v345 = vtanh.pop %v344
    %v346 = vpack.c.bf16 %v345, %v345
    %347 = vmatprep.subr.bf16.mxu0 0
    %348 = vmatpush1.bf16.msra.mxu0 %v187
    %349 = vmatprep.subr.bf16.mxu0 0
    %350 = vmatpush1.bf16.msra.mxu0 %v188
    %351 = vmatprep.subr.bf16.mxu0 0
    %352 = vmatpush1.bf16.msra.mxu0 0
    %353 = vmatprep.subr.bf16.mxu0 0
    %354 = vmatpush1.bf16.msra.mxu0 0
    %355 = vmatprep.subr.bf16.mxu0 0
    %356 = vmatpush1.bf16.msra.mxu0 0
    %357 = vmatprep.subr.bf16.mxu0 0
    %358 = vmatpush1.bf16.msra.mxu0 0
    %359 = vmatprep.subr.bf16.mxu0 0
    %360 = vmatpush1.bf16.msra.mxu0 0
    %361 = vmatprep.subr.bf16.mxu0 0
    %362 = vmatpush1.bf16.msra.mxu0 0
    %363 = vmatprep.subr.bf16.mxu0 0
    %364 = vmatpush1.bf16.msra.mxu0 0
    %365 = vmatprep.subr.bf16.mxu0 0
    %366 = vmatpush1.bf16.msra.mxu0 0
    %367 = vmatprep.subr.bf16.mxu0 0
    %368 = vmatpush1.bf16.msra.mxu0 0
    %369 = vmatprep.subr.bf16.mxu0 0
    %370 = vmatpush1.bf16.msra.mxu0 0
    %371 = vmatprep.subr.bf16.mxu0 0
    %372 = vmatpush1.bf16.msra.mxu0 0
    %373 = vmatprep.subr.bf16.mxu0 0
    %374 = vmatpush1.bf16.msra.mxu0 0
    %375 = vmatprep.subr.bf16.mxu0 0
    %376 = vmatpush1.bf16.msra.mxu0 0
    %377 = vmatprep.subr.bf16.mxu0 0
    %378 = vmatpush1.bf16.msra.mxu0 0
    %379 = vmatprep.mubr.bf16.mxu0 0
    %380 = vmatmul.mubr.bf16.gmra.mrb[0].mxu0 %v302
    %v381 = vpop.f32.mrb[0].mxu0
    %v382 = vadd.f32 0.0, %v381
    %v383 = vpop.f32.mrb[0].mxu0
    %v384 = vpop.f32.mrb[0].mxu0
    %v385 = vpop.f32.mrb[0].mxu0
    %386 = vdwg.mxu0
    %v387 = vadd.f32 %v133, %v382
    %v388 = vtanh.pop %v387
    %v389 = vpack.c.bf16 %v388, %v388
    %v391 = vsel %vm82, %v346, 0
    %393 = vmatprep.subr.bf16.mxu0 0
    %394 = vmatpush1.bf16.msra.mxu0 %v245
    %395 = vmatprep.subr.bf16.mxu0 0
    %396 = vmatpush1.bf16.msra.mxu0 %v246
    %397 = vmatprep.subr.bf16.mxu0 0
    %398 = vmatpush1.bf16.msra.mxu0 0
    %399 = vmatprep.subr.bf16.mxu0 0
    %400 = vmatpush1.bf16.msra.mxu0 0
    %401 = vmatprep.subr.bf16.mxu0 0
    %402 = vmatpush1.bf16.msra.mxu0 0
    %403 = vmatprep.subr.bf16.mxu0 0
    %404 = vmatpush1.bf16.msra.mxu0 0
    %405 = vmatprep.subr.bf16.mxu0 0
    %406 = vmatpush1.bf16.msra.mxu0 0
    %407 = vmatprep.subr.bf16.mxu0 0
    %408 = vmatpush1.bf16.msra.mxu0 0
    %409 = vmatprep.subr.bf16.mxu0 0
    %410 = vmatpush1.bf16.msra.mxu0 0
    %411 = vmatprep.subr.bf16.mxu0 0
    %412 = vmatpush1.bf16.msra.mxu0 0
    %413 = vmatprep.subr.bf16.mxu0 0
    %414 = vmatpush1.bf16.msra.mxu0 0
    %415 = vmatprep.subr.bf16.mxu0 0
    %416 = vmatpush1.bf16.msra.mxu0 0
    %417 = vmatprep.subr.bf16.mxu0 0
    %418 = vmatpush1.bf16.msra.mxu0 0
    %419 = vmatprep.subr.bf16.mxu0 0
    %420 = vmatpush1.bf16.msra.mxu0 0
    %421 = vmatprep.subr.bf16.mxu0 0
    %422 = vmatpush1.bf16.msra.mxu0 0
    %423 = vmatprep.subr.bf16.mxu0 0
    %424 = vmatpush1.bf16.msra.mxu0 0
    %425 = vmatprep.mubr.bf16.mxu0 0
    %426 = vmatmul.mubr.bf16.gmra.mrb[0].mxu0 %v391
    %v427 = vpop.f32.mrb[0].mxu0
    %v428 = vadd.f32 0.0, %v427
    %v429 = vpop.f32.mrb[0].mxu0
    %v430 = vpop.f32.mrb[0].mxu0
    %v431 = vpop.f32.mrb[0].mxu0
    %432 = vdwg.mxu0
    %v434 = vsel %vm82, %v389, 0
    %436 = vmatprep.subr.bf16.mxu0 0
    %437 = vmatpush1.bf16.msra.mxu0 %v297
    %438 = vmatprep.subr.bf16.mxu0 0
    %439 = vmatpush1.bf16.msra.mxu0 %v298
    %440 = vmatprep.subr.bf16.mxu0 0
    %441 = vmatpush1.bf16.msra.mxu0 0
    %442 = vmatprep.subr.bf16.mxu0 0
    %443 = vmatpush1.bf16.msra.mxu0 0
    %444 = vmatprep.subr.bf16.mxu0 0
    %445 = vmatpush1.bf16.msra.mxu0 0
    %446 = vmatprep.subr.bf16.mxu0 0
    %447 = vmatpush1.bf16.msra.mxu0 0
    %448 = vmatprep.subr.bf16.mxu0 0
    %449 = vmatpush1.bf16.msra.mxu0 0
    %450 = vmatprep.subr.bf16.mxu0 0
    %451 = vmatpush1.bf16.msra.mxu0 0
    %452 = vmatprep.subr.bf16.mxu0 0
    %453 = vmatpush1.bf16.msra.mxu0 0
    %454 = vmatprep.subr.bf16.mxu0 0
    %455 = vmatpush1.bf16.msra.mxu0 0
    %456 = vmatprep.subr.bf16.mxu0 0
    %457 = vmatpush1.bf16.msra.mxu0 0
    %458 = vmatprep.subr.bf16.mxu0 0
    %459 = vmatpush1.bf16.msra.mxu0 0
    %460 = vmatprep.subr.bf16.mxu0 0
    %461 = vmatpush1.bf16.msra.mxu0 0
    %462 = vmatprep.subr.bf16.mxu0 0
    %463 = vmatpush1.bf16.msra.mxu0 0
    %464 = vmatprep.subr.bf16.mxu0 0
    %465 = vmatpush1.bf16.msra.mxu0 0
    %466 = vmatprep.subr.bf16.mxu0 0
    %467 = vmatpush1.bf16.msra.mxu0 0
    %468 = vmatprep.mubr.bf16.mxu0 0
    %469 = vmatmul.mubr.bf16.gmra.mrb[0].mxu0 %v434
    %v470 = vpop.f32.mrb[0].mxu0
    %v471 = vadd.f32 %v428, %v470
    %v472 = vpop.f32.mrb[0].mxu0
    %v473 = vpop.f32.mrb[0].mxu0
    %v474 = vpop.f32.mrb[0].mxu0
    %475 = vdwg.mxu0
    %v476 = vadd.f32 %v471, %v178
    %v477 = vtanh.pop %v476
    %v478 = vpack.c.bf16 %v477, %v477
    %479 = vmatprep.subr.bf16.mxu0 0
    %480 = vmatpush1.bf16.msra.mxu0 %v187
    %481 = vmatprep.subr.bf16.mxu0 0
    %482 = vmatpush1.bf16.msra.mxu0 %v188
    %483 = vmatprep.subr.bf16.mxu0 0
    %484 = vmatpush1.bf16.msra.mxu0 0
    %485 = vmatprep.subr.bf16.mxu0 0
    %486 = vmatpush1.bf16.msra.mxu0 0
    %487 = vmatprep.subr.bf16.mxu0 0
    %488 = vmatpush1.bf16.msra.mxu0 0
    %489 = vmatprep.subr.bf16.mxu0 0
    %490 = vmatpush1.bf16.msra.mxu0 0
    %491 = vmatprep.subr.bf16.mxu0 0
    %492 = vmatpush1.bf16.msra.mxu0 0
    %493 = vmatprep.subr.bf16.mxu0 0
    %494 = vmatpush1.bf16.msra.mxu0 0
    %495 = vmatprep.subr.bf16.mxu0 0
    %496 = vmatpush1.bf16.msra.mxu0 0
    %497 = vmatprep.subr.bf16.mxu0 0
    %498 = vmatpush1.bf16.msra.mxu0 0
    %499 = vmatprep.subr.bf16.mxu0 0
    %500 = vmatpush1.bf16.msra.mxu0 0
    %501 = vmatprep.subr.bf16.mxu0 0
    %502 = vmatpush1.bf16.msra.mxu0 0
    %503 = vmatprep.subr.bf16.mxu0 0
    %504 = vmatpush1.bf16.msra.mxu0 0
    %505 = vmatprep.subr.bf16.mxu0 0
    %506 = vmatpush1.bf16.msra.mxu0 0
    %507 = vmatprep.subr.bf16.mxu0 0
    %508 = vmatpush1.bf16.msra.mxu0 0
    %509 = vmatprep.subr.bf16.mxu0 0
    %510 = vmatpush1.bf16.msra.mxu0 0
    %511 = vmatprep.mubr.bf16.mxu0 0
    %512 = vmatmul.mubr.bf16.gmra.mrb[0].mxu0 %v434
    %v513 = vpop.f32.mrb[0].mxu0
    %v514 = vadd.f32 0.0, %v513
    %v515 = vpop.f32.mrb[0].mxu0
    %v516 = vpop.f32.mrb[0].mxu0
    %v517 = vpop.f32.mrb[0].mxu0
    %518 = vdwg.mxu0
    %v519 = vadd.f32 %v138, %v514
    %v520 = vtanh.pop %v519
    %v521 = vpack.c.bf16 %v520, %v520
    %v523 = vsel %vm82, %v478, 0
    %525 = vmatprep.subr.bf16.mxu0 0
    %526 = vmatpush1.bf16.msra.mxu0 %v245
    %527 = vmatprep.subr.bf16.mxu0 0
    %528 = vmatpush1.bf16.msra.mxu0 %v246
    %529 = vmatprep.subr.bf16.mxu0 0
    %530 = vmatpush1.bf16.msra.mxu0 0
    %531 = vmatprep.subr.bf16.mxu0 0
    %532 = vmatpush1.bf16.msra.mxu0 0
    %533 = vmatprep.subr.bf16.mxu0 0
    %534 = vmatpush1.bf16.msra.mxu0 0
    %535 = vmatprep.subr.bf16.mxu0 0
    %536 = vmatpush1.bf16.msra.mxu0 0
    %537 = vmatprep.subr.bf16.mxu0 0
    %538 = vmatpush1.bf16.msra.mxu0 0
    %539 = vmatprep.subr.bf16.mxu0 0
    %540 = vmatpush1.bf16.msra.mxu0 0
    %541 = vmatprep.subr.bf16.mxu0 0
    %542 = vmatpush1.bf16.msra.mxu0 0
    %543 = vmatprep.subr.bf16.mxu0 0
    %544 = vmatpush1.bf16.msra.mxu0 0
    %545 = vmatprep.subr.bf16.mxu0 0
    %546 = vmatpush1.bf16.msra.mxu0 0
    %547 = vmatprep.subr.bf16.mxu0 0
    %548 = vmatpush1.bf16.msra.mxu0 0
    %549 = vmatprep.subr.bf16.mxu0 0
    %550 = vmatpush1.bf16.msra.mxu0 0
    %551 = vmatprep.subr.bf16.mxu0 0
    %552 = vmatpush1.bf16.msra.mxu0 0
    %553 = vmatprep.subr.bf16.mxu0 0
    %554 = vmatpush1.bf16.msra.mxu0 0
    %555 = vmatprep.subr.bf16.mxu0 0
    %556 = vmatpush1.bf16.msra.mxu0 0
    %557 = vmatprep.mubr.bf16.mxu0 0
    %558 = vmatmul.mubr.bf16.gmra.mrb[0].mxu0 %v523
    %v559 = vpop.f32.mrb[0].mxu0
    %v560 = vadd.f32 0.0, %v559
    %v561 = vpop.f32.mrb[0].mxu0
    %v562 = vpop.f32.mrb[0].mxu0
    %v563 = vpop.f32.mrb[0].mxu0
    %564 = vdwg.mxu0
    %v566 = vsel %vm82, %v521, 0
    %568 = vmatprep.subr.bf16.mxu0 0
    %569 = vmatpush1.bf16.msra.mxu0 %v297
    %570 = vmatprep.subr.bf16.mxu0 0
    %571 = vmatpush1.bf16.msra.mxu0 %v298
    %572 = vmatprep.subr.bf16.mxu0 0
    %573 = vmatpush1.bf16.msra.mxu0 0
    %574 = vmatprep.subr.bf16.mxu0 0
    %575 = vmatpush1.bf16.msra.mxu0 0
    %576 = vmatprep.subr.bf16.mxu0 0
    %577 = vmatpush1.bf16.msra.mxu0 0
    %578 = vmatprep.subr.bf16.mxu0 0
    %579 = vmatpush1.bf16.msra.mxu0 0
    %580 = vmatprep.subr.bf16.mxu0 0
    %581 = vmatpush1.bf16.msra.mxu0 0
    %582 = vmatprep.subr.bf16.mxu0 0
    %583 = vmatpush1.bf16.msra.mxu0 0
    %584 = vmatprep.subr.bf16.mxu0 0
    %585 = vmatpush1.bf16.msra.mxu0 0
    %586 = vmatprep.subr.bf16.mxu0 0
    %587 = vmatpush1.bf16.msra.mxu0 0
    %588 = vmatprep.subr.bf16.mxu0 0
    %589 = vmatpush1.bf16.msra.mxu0 0
    %590 = vmatprep.subr.bf16.mxu0 0
    %591 = vmatpush1.bf16.msra.mxu0 0
    %592 = vmatprep.subr.bf16.mxu0 0
    %593 = vmatpush1.bf16.msra.mxu0 0
    %594 = vmatprep.subr.bf16.mxu0 0
    %595 = vmatpush1.bf16.msra.mxu0 0
    %596 = vmatprep.subr.bf16.mxu0 0
    %597 = vmatpush1.bf16.msra.mxu0 0
    %598 = vmatprep.subr.bf16.mxu0 0
    %599 = vmatpush1.bf16.msra.mxu0 0
    %600 = vmatprep.mubr.bf16.mxu0 0
    %601 = vmatmul.mubr.bf16.gmra.mrb[0].mxu0 %v566
    %v602 = vpop.f32.mrb[0].mxu0
    %v603 = vadd.f32 %v560, %v602
    %v604 = vpop.f32.mrb[0].mxu0
    %v605 = vpop.f32.mrb[0].mxu0
    %v606 = vpop.f32.mrb[0].mxu0
    %607 = vdwg.mxu0
    %v608 = vadd.f32 %v603, %v178
    %v609 = vtanh.pop %v608
    %v610 = vpack.c.bf16 %v609, %v609
    %611 = vmatprep.subr.bf16.mxu0 0
    %612 = vmatpush1.bf16.msra.mxu0 %v187
    %613 = vmatprep.subr.bf16.mxu0 0
    %614 = vmatpush1.bf16.msra.mxu0 %v188
    %615 = vmatprep.subr.bf16.mxu0 0
    %616 = vmatpush1.bf16.msra.mxu0 0
    %617 = vmatprep.subr.bf16.mxu0 0
    %618 = vmatpush1.bf16.msra.mxu0 0
    %619 = vmatprep.subr.bf16.mxu0 0
    %620 = vmatpush1.bf16.msra.mxu0 0
    %621 = vmatprep.subr.bf16.mxu0 0
    %622 = vmatpush1.bf16.msra.mxu0 0
    %623 = vmatprep.subr.bf16.mxu0 0
    %624 = vmatpush1.bf16.msra.mxu0 0
    %625 = vmatprep.subr.bf16.mxu0 0
    %626 = vmatpush1.bf16.msra.mxu0 0
    %627 = vmatprep.subr.bf16.mxu0 0
    %628 = vmatpush1.bf16.msra.mxu0 0
    %629 = vmatprep.subr.bf16.mxu0 0
    %630 = vmatpush1.bf16.msra.mxu0 0
    %631 = vmatprep.subr.bf16.mxu0 0
    %632 = vmatpush1.bf16.msra.mxu0 0
    %633 = vmatprep.subr.bf16.mxu0 0
    %634 = vmatpush1.bf16.msra.mxu0 0
    %635 = vmatprep.subr.bf16.mxu0 0
    %636 = vmatpush1.bf16.msra.mxu0 0
    %637 = vmatprep.subr.bf16.mxu0 0
    %638 = vmatpush1.bf16.msra.mxu0 0
    %639 = vmatprep.subr.bf16.mxu0 0
    %640 = vmatpush1.bf16.msra.mxu0 0
    %641 = vmatprep.subr.bf16.mxu0 0
    %642 = vmatpush1.bf16.msra.mxu0 0
    %643 = vmatprep.mubr.bf16.mxu0 0
    %644 = vmatmul.mubr.bf16.gmra.mrb[0].mxu0 %v566
    %v645 = vpop.f32.mrb[0].mxu0
    %v646 = vadd.f32 0.0, %v645
    %v647 = vpop.f32.mrb[0].mxu0
    %v648 = vpop.f32.mrb[0].mxu0
    %v649 = vpop.f32.mrb[0].mxu0
    %650 = vdwg.mxu0
    %v651 = vadd.f32 %v141, %v646
    %v652 = vtanh.pop %v651
    %v653 = vpack.c.bf16 %v652, %v652
    %v655 = vsel %vm82, %v610, 0
    %657 = vmatprep.subr.bf16.mxu0 0
    %658 = vmatpush1.bf16.msra.mxu0 %v245
    %659 = vmatprep.subr.bf16.mxu0 0
    %660 = vmatpush1.bf16.msra.mxu0 %v246
    %661 = vmatprep.subr.bf16.mxu0 0
    %662 = vmatpush1.bf16.msra.mxu0 0
    %663 = vmatprep.subr.bf16.mxu0 0
    %664 = vmatpush1.bf16.msra.mxu0 0
    %665 = vmatprep.subr.bf16.mxu0 0
    %666 = vmatpush1.bf16.msra.mxu0 0
    %667 = vmatprep.subr.bf16.mxu0 0
    %668 = vmatpush1.bf16.msra.mxu0 0
    %669 = vmatprep.subr.bf16.mxu0 0
    %670 = vmatpush1.bf16.msra.mxu0 0
    %671 = vmatprep.subr.bf16.mxu0 0
    %672 = vmatpush1.bf16.msra.mxu0 0
    %673 = vmatprep.subr.bf16.mxu0 0
    %674 = vmatpush1.bf16.msra.mxu0 0
    %675 = vmatprep.subr.bf16.mxu0 0
    %676 = vmatpush1.bf16.msra.mxu0 0
    %677 = vmatprep.subr.bf16.mxu0 0
    %678 = vmatpush1.bf16.msra.mxu0 0
    %679 = vmatprep.subr.bf16.mxu0 0
    %680 = vmatpush1.bf16.msra.mxu0 0
    %681 = vmatprep.subr.bf16.mxu0 0
    %682 = vmatpush1.bf16.msra.mxu0 0
    %683 = vmatprep.subr.bf16.mxu0 0
    %684 = vmatpush1.bf16.msra.mxu0 0
    %685 = vmatprep.subr.bf16.mxu0 0
    %686 = vmatpush1.bf16.msra.mxu0 0
    %687 = vmatprep.subr.bf16.mxu0 0
    %688 = vmatpush1.bf16.msra.mxu0 0
    %689 = vmatprep.mubr.bf16.mxu0 0
    %690 = vmatmul.mubr.bf16.gmra.mrb[0].mxu0 %v655
    %v691 = vpop.f32.mrb[0].mxu0
    %v692 = vadd.f32 0.0, %v691
    %v693 = vpop.f32.mrb[0].mxu0
    %v694 = vpop.f32.mrb[0].mxu0
    %v695 = vpop.f32.mrb[0].mxu0
    %696 = vdwg.mxu0
    %v698 = vsel %vm82, %v653, 0
    %700 = vmatprep.subr.bf16.mxu0 0
    %701 = vmatpush1.bf16.msra.mxu0 %v297
    %702 = vmatprep.subr.bf16.mxu0 0
    %703 = vmatpush1.bf16.msra.mxu0 %v298
    %704 = vmatprep.subr.bf16.mxu0 0
    %705 = vmatpush1.bf16.msra.mxu0 0
    %706 = vmatprep.subr.bf16.mxu0 0
    %707 = vmatpush1.bf16.msra.mxu0 0
    %708 = vmatprep.subr.bf16.mxu0 0
    %709 = vmatpush1.bf16.msra.mxu0 0
    %710 = vmatprep.subr.bf16.mxu0 0
    %711 = vmatpush1.bf16.msra.mxu0 0
    %712 = vmatprep.subr.bf16.mxu0 0
    %713 = vmatpush1.bf16.msra.mxu0 0
    %714 = vmatprep.subr.bf16.mxu0 0
    %715 = vmatpush1.bf16.msra.mxu0 0
    %716 = vmatprep.subr.bf16.mxu0 0
    %717 = vmatpush1.bf16.msra.mxu0 0
    %718 = vmatprep.subr.bf16.mxu0 0
    %719 = vmatpush1.bf16.msra.mxu0 0
    %720 = vmatprep.subr.bf16.mxu0 0
    %721 = vmatpush1.bf16.msra.mxu0 0
    %722 = vmatprep.subr.bf16.mxu0 0
    %723 = vmatpush1.bf16.msra.mxu0 0
    %724 = vmatprep.subr.bf16.mxu0 0
    %725 = vmatpush1.bf16.msra.mxu0 0
    %726 = vmatprep.subr.bf16.mxu0 0
    %727 = vmatpush1.bf16.msra.mxu0 0
    %728 = vmatprep.subr.bf16.mxu0 0
    %729 = vmatpush1.bf16.msra.mxu0 0
    %730 = vmatprep.subr.bf16.mxu0 0
    %731 = vmatpush1.bf16.msra.mxu0 0
    %732 = vmatprep.mubr.bf16.mxu0 0
    %733 = vmatmul.mubr.bf16.gmra.mrb[0].mxu0 %v698
    %v734 = vpop.f32.mrb[0].mxu0
    %v735 = vadd.f32 %v692, %v734
    %v736 = vpop.f32.mrb[0].mxu0
    %v737 = vpop.f32.mrb[0].mxu0
    %v738 = vpop.f32.mrb[0].mxu0
    %739 = vdwg.mxu0
    %v740 = vadd.f32 %v735, %v178
    %v741 = vtanh.pop %v740
    %v742 = vpack.c.bf16 %v741, %v741
    %743 = vmatprep.subr.bf16.mxu0 0
    %744 = vmatpush1.bf16.msra.mxu0 %v187
    %745 = vmatprep.subr.bf16.mxu0 0
    %746 = vmatpush1.bf16.msra.mxu0 %v188
    %747 = vmatprep.subr.bf16.mxu0 0
    %748 = vmatpush1.bf16.msra.mxu0 0
    %749 = vmatprep.subr.bf16.mxu0 0
    %750 = vmatpush1.bf16.msra.mxu0 0
    %751 = vmatprep.subr.bf16.mxu0 0
    %752 = vmatpush1.bf16.msra.mxu0 0
    %753 = vmatprep.subr.bf16.mxu0 0
    %754 = vmatpush1.bf16.msra.mxu0 0
    %755 = vmatprep.subr.bf16.mxu0 0
    %756 = vmatpush1.bf16.msra.mxu0 0
    %757 = vmatprep.subr.bf16.mxu0 0
    %758 = vmatpush1.bf16.msra.mxu0 0
    %759 = vmatprep.subr.bf16.mxu0 0
    %760 = vmatpush1.bf16.msra.mxu0 0
    %761 = vmatprep.subr.bf16.mxu0 0
    %762 = vmatpush1.bf16.msra.mxu0 0
    %763 = vmatprep.subr.bf16.mxu0 0
    %764 = vmatpush1.bf16.msra.mxu0 0
    %765 = vmatprep.subr.bf16.mxu0 0
    %766 = vmatpush1.bf16.msra.mxu0 0
    %767 = vmatprep.subr.bf16.mxu0 0
    %768 = vmatpush1.bf16.msra.mxu0 0
    %769 = vmatprep.subr.bf16.mxu0 0
    %770 = vmatpush1.bf16.msra.mxu0 0
    %771 = vmatprep.subr.bf16.mxu0 0
    %772 = vmatpush1.bf16.msra.mxu0 0
    %773 = vmatprep.subr.bf16.mxu0 0
    %774 = vmatpush1.bf16.msra.mxu0 0
    %775 = vmatprep.mubr.bf16.mxu0 0
    %776 = vmatmul.mubr.bf16.gmra.mrb[0].mxu0 %v698
    %v777 = vpop.f32.mrb[0].mxu0
    %v778 = vadd.f32 0.0, %v777
    %v779 = vpop.f32.mrb[0].mxu0
    %v780 = vpop.f32.mrb[0].mxu0
    %v781 = vpop.f32.mrb[0].mxu0
    %782 = vdwg.mxu0
    %v783 = vadd.f32 %v146, %v778
    %v784 = vtanh.pop %v783
    %v785 = vpack.c.bf16 %v784, %v784
    %v787 = vsel %vm82, %v742, 0
    %789 = vmatprep.subr.bf16.mxu0 0
    %790 = vmatpush1.bf16.msra.mxu0 %v245
    %791 = vmatprep.subr.bf16.mxu0 0
    %792 = vmatpush1.bf16.msra.mxu0 %v246
    %793 = vmatprep.subr.bf16.mxu0 0
    %794 = vmatpush1.bf16.msra.mxu0 0
    %795 = vmatprep.subr.bf16.mxu0 0
    %796 = vmatpush1.bf16.msra.mxu0 0
    %797 = vmatprep.subr.bf16.mxu0 0
    %798 = vmatpush1.bf16.msra.mxu0 0
    %799 = vmatprep.subr.bf16.mxu0 0
    %800 = vmatpush1.bf16.msra.mxu0 0
    %801 = vmatprep.subr.bf16.mxu0 0
    %802 = vmatpush1.bf16.msra.mxu0 0
    %803 = vmatprep.subr.bf16.mxu0 0
    %804 = vmatpush1.bf16.msra.mxu0 0
    %805 = vmatprep.subr.bf16.mxu0 0
    %806 = vmatpush1.bf16.msra.mxu0 0
    %807 = vmatprep.subr.bf16.mxu0 0
    %808 = vmatpush1.bf16.msra.mxu0 0
    %809 = vmatprep.subr.bf16.mxu0 0
    %810 = vmatpush1.bf16.msra.mxu0 0
    %811 = vmatprep.subr.bf16.mxu0 0
    %812 = vmatpush1.bf16.msra.mxu0 0
    %813 = vmatprep.subr.bf16.mxu0 0
    %814 = vmatpush1.bf16.msra.mxu0 0
    %815 = vmatprep.subr.bf16.mxu0 0
    %816 = vmatpush1.bf16.msra.mxu0 0
    %817 = vmatprep.subr.bf16.mxu0 0
    %818 = vmatpush1.bf16.msra.mxu0 0
    %819 = vmatprep.subr.bf16.mxu0 0
    %820 = vmatpush1.bf16.msra.mxu0 0
    %821 = vmatprep.mubr.bf16.mxu0 0
    %822 = vmatmul.mubr.bf16.gmra.mrb[0].mxu0 %v787
    %v823 = vpop.f32.mrb[0].mxu0
    %v824 = vadd.f32 0.0, %v823
    %v825 = vpop.f32.mrb[0].mxu0
    %v826 = vpop.f32.mrb[0].mxu0
    %v827 = vpop.f32.mrb[0].mxu0
    %828 = vdwg.mxu0
    %v830 = vsel %vm82, %v785, 0
    %832 = vmatprep.subr.bf16.mxu0 0
    %833 = vmatpush1.bf16.msra.mxu0 %v297
    %834 = vmatprep.subr.bf16.mxu0 0
    %835 = vmatpush1.bf16.msra.mxu0 %v298
    %836 = vmatprep.subr.bf16.mxu0 0
    %837 = vmatpush1.bf16.msra.mxu0 0
    %838 = vmatprep.subr.bf16.mxu0 0
    %839 = vmatpush1.bf16.msra.mxu0 0
    %840 = vmatprep.subr.bf16.mxu0 0
    %841 = vmatpush1.bf16.msra.mxu0 0
    %842 = vmatprep.subr.bf16.mxu0 0
    %843 = vmatpush1.bf16.msra.mxu0 0
    %844 = vmatprep.subr.bf16.mxu0 0
    %845 = vmatpush1.bf16.msra.mxu0 0
    %846 = vmatprep.subr.bf16.mxu0 0
    %847 = vmatpush1.bf16.msra.mxu0 0
    %848 = vmatprep.subr.bf16.mxu0 0
    %849 = vmatpush1.bf16.msra.mxu0 0
    %850 = vmatprep.subr.bf16.mxu0 0
    %851 = vmatpush1.bf16.msra.mxu0 0
    %852 = vmatprep.subr.bf16.mxu0 0
    %853 = vmatpush1.bf16.msra.mxu0 0
    %854 = vmatprep.subr.bf16.mxu0 0
    %855 = vmatpush1.bf16.msra.mxu0 0
    %856 = vmatprep.subr.bf16.mxu0 0
    %857 = vmatpush1.bf16.msra.mxu0 0
    %858 = vmatprep.subr.bf16.mxu0 0
    %859 = vmatpush1.bf16.msra.mxu0 0
    %860 = vmatprep.subr.bf16.mxu0 0
    %861 = vmatpush1.bf16.msra.mxu0 0
    %862 = vmatprep.subr.bf16.mxu0 0
    %863 = vmatpush1.bf16.msra.mxu0 0
    %864 = vmatprep.mubr.bf16.mxu0 0
    %865 = vmatmul.mubr.bf16.gmra.mrb[0].mxu0 %v830
    %v866 = vpop.f32.mrb[0].mxu0
    %v867 = vadd.f32 %v824, %v866
    %v868 = vpop.f32.mrb[0].mxu0
    %v869 = vpop.f32.mrb[0].mxu0
    %v870 = vpop.f32.mrb[0].mxu0
    %871 = vdwg.mxu0
    %v872 = vadd.f32 %v867, %v178
    %v873 = vtanh.pop %v872
    %v874 = vpack.c.bf16 %v873, %v873
    %875 = vmatprep.subr.bf16.mxu0 0
    %876 = vmatpush1.bf16.msra.mxu0 %v187
    %877 = vmatprep.subr.bf16.mxu0 0
    %878 = vmatpush1.bf16.msra.mxu0 %v188
    %879 = vmatprep.subr.bf16.mxu0 0
    %880 = vmatpush1.bf16.msra.mxu0 0
    %881 = vmatprep.subr.bf16.mxu0 0
    %882 = vmatpush1.bf16.msra.mxu0 0
    %883 = vmatprep.subr.bf16.mxu0 0
    %884 = vmatpush1.bf16.msra.mxu0 0
    %885 = vmatprep.subr.bf16.mxu0 0
    %886 = vmatpush1.bf16.msra.mxu0 0
    %887 = vmatprep.subr.bf16.mxu0 0
    %888 = vmatpush1.bf16.msra.mxu0 0
    %889 = vmatprep.subr.bf16.mxu0 0
    %890 = vmatpush1.bf16.msra.mxu0 0
    %891 = vmatprep.subr.bf16.mxu0 0
    %892 = vmatpush1.bf16.msra.mxu0 0
    %893 = vmatprep.subr.bf16.mxu0 0
    %894 = vmatpush1.bf16.msra.mxu0 0
    %895 = vmatprep.subr.bf16.mxu0 0
    %896 = vmatpush1.bf16.msra.mxu0 0
    %897 = vmatprep.subr.bf16.mxu0 0
    %898 = vmatpush1.bf16.msra.mxu0 0
    %899 = vmatprep.subr.bf16.mxu0 0
    %900 = vmatpush1.bf16.msra.mxu0 0
    %901 = vmatprep.subr.bf16.mxu0 0
    %902 = vmatpush1.bf16.msra.mxu0 0
    %903 = vmatprep.subr.bf16.mxu0 0
    %904 = vmatpush1.bf16.msra.mxu0 0
    %905 = vmatprep.subr.bf16.mxu0 0
    %906 = vmatpush1.bf16.msra.mxu0 0
    %907 = vmatprep.mubr.bf16.mxu0 0
    %908 = vmatmul.mubr.bf16.gmra.mrb[0].mxu0 %v830
    %v909 = vpop.f32.mrb[0].mxu0
    %v910 = vadd.f32 0.0, %v909
    %v911 = vpop.f32.mrb[0].mxu0
    %v912 = vpop.f32.mrb[0].mxu0
    %v913 = vpop.f32.mrb[0].mxu0
    %914 = vdwg.mxu0
    %v915 = vadd.f32 %v149, %v910
    %v916 = vtanh.pop %v915
    %v917 = vpack.c.bf16 %v916, %v916
    %v919 = vsel %vm82, %v874, 0
    %921 = vmatprep.subr.bf16.mxu0 0
    %922 = vmatpush1.bf16.msra.mxu0 %v245
    %923 = vmatprep.subr.bf16.mxu0 0
    %924 = vmatpush1.bf16.msra.mxu0 %v246
    %925 = vmatprep.subr.bf16.mxu0 0
    %926 = vmatpush1.bf16.msra.mxu0 0
    %927 = vmatprep.subr.bf16.mxu0 0
    %928 = vmatpush1.bf16.msra.mxu0 0
    %929 = vmatprep.subr.bf16.mxu0 0
    %930 = vmatpush1.bf16.msra.mxu0 0
    %931 = vmatprep.subr.bf16.mxu0 0
    %932 = vmatpush1.bf16.msra.mxu0 0
    %933 = vmatprep.subr.bf16.mxu0 0
    %934 = vmatpush1.bf16.msra.mxu0 0
    %935 = vmatprep.subr.bf16.mxu0 0
    %936 = vmatpush1.bf16.msra.mxu0 0
    %937 = vmatprep.subr.bf16.mxu0 0
    %938 = vmatpush1.bf16.msra.mxu0 0
    %939 = vmatprep.subr.bf16.mxu0 0
    %940 = vmatpush1.bf16.msra.mxu0 0
    %941 = vmatprep.subr.bf16.mxu0 0
    %942 = vmatpush1.bf16.msra.mxu0 0
    %943 = vmatprep.subr.bf16.mxu0 0
    %944 = vmatpush1.bf16.msra.mxu0 0
    %945 = vmatprep.subr.bf16.mxu0 0
    %946 = vmatpush1.bf16.msra.mxu0 0
    %947 = vmatprep.subr.bf16.mxu0 0
    %948 = vmatpush1.bf16.msra.mxu0 0
    %949 = vmatprep.subr.bf16.mxu0 0
    %950 = vmatpush1.bf16.msra.mxu0 0
    %951 = vmatprep.subr.bf16.mxu0 0
    %952 = vmatpush1.bf16.msra.mxu0 0
    %953 = vmatprep.mubr.bf16.mxu0 0
    %954 = vmatmul.mubr.bf16.gmra.mrb[0].mxu0 %v919
    %v955 = vpop.f32.mrb[0].mxu0
    %v956 = vadd.f32 0.0, %v955
    %v957 = vpop.f32.mrb[0].mxu0
    %v958 = vpop.f32.mrb[0].mxu0
    %v959 = vpop.f32.mrb[0].mxu0
    %960 = vdwg.mxu0
    %v962 = vsel %vm82, %v917, 0
    %964 = vmatprep.subr.bf16.mxu0 0
    %965 = vmatpush1.bf16.msra.mxu0 %v297
    %966 = vmatprep.subr.bf16.mxu0 0
    %967 = vmatpush1.bf16.msra.mxu0 %v298
    %968 = vmatprep.subr.bf16.mxu0 0
    %969 = vmatpush1.bf16.msra.mxu0 0
    %970 = vmatprep.subr.bf16.mxu0 0
    %971 = vmatpush1.bf16.msra.mxu0 0
    %972 = vmatprep.subr.bf16.mxu0 0
    %973 = vmatpush1.bf16.msra.mxu0 0
    %974 = vmatprep.subr.bf16.mxu0 0
    %975 = vmatpush1.bf16.msra.mxu0 0
    %976 = vmatprep.subr.bf16.mxu0 0
    %977 = vmatpush1.bf16.msra.mxu0 0
    %978 = vmatprep.subr.bf16.mxu0 0
    %979 = vmatpush1.bf16.msra.mxu0 0
    %980 = vmatprep.subr.bf16.mxu0 0
    %981 = vmatpush1.bf16.msra.mxu0 0
    %982 = vmatprep.subr.bf16.mxu0 0
    %983 = vmatpush1.bf16.msra.mxu0 0
    %984 = vmatprep.subr.bf16.mxu0 0
    %985 = vmatpush1.bf16.msra.mxu0 0
    %986 = vmatprep.subr.bf16.mxu0 0
    %987 = vmatpush1.bf16.msra.mxu0 0
    %988 = vmatprep.subr.bf16.mxu0 0
    %989 = vmatpush1.bf16.msra.mxu0 0
    %990 = vmatprep.subr.bf16.mxu0 0
    %991 = vmatpush1.bf16.msra.mxu0 0
    %992 = vmatprep.subr.bf16.mxu0 0
    %993 = vmatpush1.bf16.msra.mxu0 0
    %994 = vmatprep.subr.bf16.mxu0 0
    %995 = vmatpush1.bf16.msra.mxu0 0
    %996 = vmatprep.mubr.bf16.mxu0 0
    %997 = vmatmul.mubr.bf16.gmra.mrb[0].mxu0 %v962
    %v998 = vpop.f32.mrb[0].mxu0
    %v999 = vadd.f32 %v956, %v998
    %v1000 = vpop.f32.mrb[0].mxu0
    %v1001 = vpop.f32.mrb[0].mxu0
    %v1002 = vpop.f32.mrb[0].mxu0
    %1003 = vdwg.mxu0
    %v1004 = vadd.f32 %v999, %v178
    %v1005 = vtanh.pop %v1004
    %v1006 = vpack.c.bf16 %v1005, %v1005
    %1007 = vmatprep.subr.bf16.mxu0 0
    %1008 = vmatpush1.bf16.msra.mxu0 %v187
    %1009 = vmatprep.subr.bf16.mxu0 0
    %1010 = vmatpush1.bf16.msra.mxu0 %v188
    %1011 = vmatprep.subr.bf16.mxu0 0
    %1012 = vmatpush1.bf16.msra.mxu0 0
    %1013 = vmatprep.subr.bf16.mxu0 0
    %1014 = vmatpush1.bf16.msra.mxu0 0
    %1015 = vmatprep.subr.bf16.mxu0 0
    %1016 = vmatpush1.bf16.msra.mxu0 0
    %1017 = vmatprep.subr.bf16.mxu0 0
    %1018 = vmatpush1.bf16.msra.mxu0 0
    %1019 = vmatprep.subr.bf16.mxu0 0
    %1020 = vmatpush1.bf16.msra.mxu0 0
    %1021 = vmatprep.subr.bf16.mxu0 0
    %1022 = vmatpush1.bf16.msra.mxu0 0
    %1023 = vmatprep.subr.bf16.mxu0 0
    %1024 = vmatpush1.bf16.msra.mxu0 0
    %1025 = vmatprep.subr.bf16.mxu0 0
    %1026 = vmatpush1.bf16.msra.mxu0 0
    %1027 = vmatprep.subr.bf16.mxu0 0
    %1028 = vmatpush1.bf16.msra.mxu0 0
    %1029 = vmatprep.subr.bf16.mxu0 0
    %1030 = vmatpush1.bf16.msra.mxu0 0
    %1031 = vmatprep.subr.bf16.mxu0 0
    %1032 = vmatpush1.bf16.msra.mxu0 0
    %1033 = vmatprep.subr.bf16.mxu0 0
    %1034 = vmatpush1.bf16.msra.mxu0 0
    %1035 = vmatprep.subr.bf16.mxu0 0
    %1036 = vmatpush1.bf16.msra.mxu0 0
    %1037 = vmatprep.subr.bf16.mxu0 0
    %1038 = vmatpush1.bf16.msra.mxu0 0
    %1039 = vmatprep.mubr.bf16.mxu0 0
    %1040 = vmatmul.mubr.bf16.gmra.mrb[0].mxu0 %v962
    %v1041 = vpop.f32.mrb[0].mxu0
    %v1042 = vadd.f32 0.0, %v1041
    %v1043 = vpop.f32.mrb[0].mxu0
    %v1044 = vpop.f32.mrb[0].mxu0
    %v1045 = vpop.f32.mrb[0].mxu0
    %1046 = vdwg.mxu0
    %v1047 = vadd.f32 %v154, %v1042
    %v1048 = vtanh.pop %v1047
    %v1049 = vpack.c.bf16 %v1048, %v1048
    %v1051 = vsel %vm82, %v1006, 0
    %1053 = vmatprep.subr.bf16.mxu0 0
    %1054 = vmatpush1.bf16.msra.mxu0 %v245
    %1055 = vmatprep.subr.bf16.mxu0 0
    %1056 = vmatpush1.bf16.msra.mxu0 %v246
    %1057 = vmatprep.subr.bf16.mxu0 0
    %1058 = vmatpush1.bf16.msra.mxu0 0
    %1059 = vmatprep.subr.bf16.mxu0 0
    %1060 = vmatpush1.bf16.msra.mxu0 0
    %1061 = vmatprep.subr.bf16.mxu0 0
    %1062 = vmatpush1.bf16.msra.mxu0 0
    %1063 = vmatprep.subr.bf16.mxu0 0
    %1064 = vmatpush1.bf16.msra.mxu0 0
    %1065 = vmatprep.subr.bf16.mxu0 0
    %1066 = vmatpush1.bf16.msra.mxu0 0
    %1067 = vmatprep.subr.bf16.mxu0 0
    %1068 = vmatpush1.bf16.msra.mxu0 0
    %1069 = vmatprep.subr.bf16.mxu0 0
    %1070 = vmatpush1.bf16.msra.mxu0 0
    %1071 = vmatprep.subr.bf16.mxu0 0
    %1072 = vmatpush1.bf16.msra.mxu0 0
    %1073 = vmatprep.subr.bf16.mxu0 0
    %1074 = vmatpush1.bf16.msra.mxu0 0
    %1075 = vmatprep.subr.bf16.mxu0 0
    %1076 = vmatpush1.bf16.msra.mxu0 0
    %1077 = vmatprep.subr.bf16.mxu0 0
    %1078 = vmatpush1.bf16.msra.mxu0 0
    %1079 = vmatprep.subr.bf16.mxu0 0
    %1080 = vmatpush1.bf16.msra.mxu0 0
    %1081 = vmatprep.subr.bf16.mxu0 0
    %1082 = vmatpush1.bf16.msra.mxu0 0
    %1083 = vmatprep.subr.bf16.mxu0 0
    %1084 = vmatpush1.bf16.msra.mxu0 0
    %1085 = vmatprep.mubr.bf16.mxu0 0
    %1086 = vmatmul.mubr.bf16.gmra.mrb[0].mxu0 %v1051
    %v1087 = vpop.f32.mrb[0].mxu0
    %v1088 = vadd.f32 0.0, %v1087
    %v1089 = vpop.f32.mrb[0].mxu0
    %v1090 = vpop.f32.mrb[0].mxu0
    %v1091 = vpop.f32.mrb[0].mxu0
    %1092 = vdwg.mxu0
    %v1094 = vsel %vm82, %v1049, 0
    %1096 = vmatprep.subr.bf16.mxu0 0
    %1097 = vmatpush1.bf16.msra.mxu0 %v297
    %1098 = vmatprep.subr.bf16.mxu0 0
    %1099 = vmatpush1.bf16.msra.mxu0 %v298
    %1100 = vmatprep.subr.bf16.mxu0 0
    %1101 = vmatpush1.bf16.msra.mxu0 0
    %1102 = vmatprep.subr.bf16.mxu0 0
    %1103 = vmatpush1.bf16.msra.mxu0 0
    %1104 = vmatprep.subr.bf16.mxu0 0
    %1105 = vmatpush1.bf16.msra.mxu0 0
    %1106 = vmatprep.subr.bf16.mxu0 0
    %1107 = vmatpush1.bf16.msra.mxu0 0
    %1108 = vmatprep.subr.bf16.mxu0 0
    %1109 = vmatpush1.bf16.msra.mxu0 0
    %1110 = vmatprep.subr.bf16.mxu0 0
    %1111 = vmatpush1.bf16.msra.mxu0 0
    %1112 = vmatprep.subr.bf16.mxu0 0
    %1113 = vmatpush1.bf16.msra.mxu0 0
    %1114 = vmatprep.subr.bf16.mxu0 0
    %1115 = vmatpush1.bf16.msra.mxu0 0
    %1116 = vmatprep.subr.bf16.mxu0 0
    %1117 = vmatpush1.bf16.msra.mxu0 0
    %1118 = vmatprep.subr.bf16.mxu0 0
    %1119 = vmatpush1.bf16.msra.mxu0 0
    %1120 = vmatprep.subr.bf16.mxu0 0
    %1121 = vmatpush1.bf16.msra.mxu0 0
    %1122 = vmatprep.subr.bf16.mxu0 0
    %1123 = vmatpush1.bf16.msra.mxu0 0
    %1124 = vmatprep.subr.bf16.mxu0 0
    %1125 = vmatpush1.bf16.msra.mxu0 0
    %1126 = vmatprep.subr.bf16.mxu0 0
    %1127 = vmatpush1.bf16.msra.mxu0 0
    %1128 = vmatprep.mubr.bf16.mxu0 0
    %1129 = vmatmul.mubr.bf16.gmra.mrb[0].mxu0 %v1094
    %v1130 = vpop.f32.mrb[0].mxu0
    %v1131 = vadd.f32 %v1088, %v1130
    %v1132 = vpop.f32.mrb[0].mxu0
    %v1133 = vpop.f32.mrb[0].mxu0
    %v1134 = vpop.f32.mrb[0].mxu0
    %1135 = vdwg.mxu0
    %v1136 = vadd.f32 %v1131, %v178
    %v1137 = vtanh.pop %v1136
    %v1138 = vpack.c.bf16 %v1137, %v1137
    %1139 = vmatprep.subr.bf16.mxu0 0
    %1140 = vmatpush1.bf16.msra.mxu0 %v187
    %1141 = vmatprep.subr.bf16.mxu0 0
    %1142 = vmatpush1.bf16.msra.mxu0 %v188
    %1143 = vmatprep.subr.bf16.mxu0 0
    %1144 = vmatpush1.bf16.msra.mxu0 0
    %1145 = vmatprep.subr.bf16.mxu0 0
    %1146 = vmatpush1.bf16.msra.mxu0 0
    %1147 = vmatprep.subr.bf16.mxu0 0
    %1148 = vmatpush1.bf16.msra.mxu0 0
    %1149 = vmatprep.subr.bf16.mxu0 0
    %1150 = vmatpush1.bf16.msra.mxu0 0
    %1151 = vmatprep.subr.bf16.mxu0 0
    %1152 = vmatpush1.bf16.msra.mxu0 0
    %1153 = vmatprep.subr.bf16.mxu0 0
    %1154 = vmatpush1.bf16.msra.mxu0 0
    %1155 = vmatprep.subr.bf16.mxu0 0
    %1156 = vmatpush1.bf16.msra.mxu0 0
    %1157 = vmatprep.subr.bf16.mxu0 0
    %1158 = vmatpush1.bf16.msra.mxu0 0
    %1159 = vmatprep.subr.bf16.mxu0 0
    %1160 = vmatpush1.bf16.msra.mxu0 0
    %1161 = vmatprep.subr.bf16.mxu0 0
    %1162 = vmatpush1.bf16.msra.mxu0 0
    %1163 = vmatprep.subr.bf16.mxu0 0
    %1164 = vmatpush1.bf16.msra.mxu0 0
    %1165 = vmatprep.subr.bf16.mxu0 0
    %1166 = vmatpush1.bf16.msra.mxu0 0
    %1167 = vmatprep.subr.bf16.mxu0 0
    %1168 = vmatpush1.bf16.msra.mxu0 0
    %1169 = vmatprep.subr.bf16.mxu0 0
    %1170 = vmatpush1.bf16.msra.mxu0 0
    %1171 = vmatprep.mubr.bf16.mxu0 0
    %1172 = vmatmul.mubr.bf16.gmra.mrb[0].mxu0 %v1094
    %v1173 = vpop.f32.mrb[0].mxu0
    %v1174 = vadd.f32 0.0, %v1173
    %v1175 = vpop.f32.mrb[0].mxu0
    %v1176 = vpop.f32.mrb[0].mxu0
    %v1177 = vpop.f32.mrb[0].mxu0
    %1178 = vdwg.mxu0
    %v1179 = vadd.f32 %v157, %v1174
    %v1180 = vtanh.pop %v1179
    %v1181 = vpack.c.bf16 %v1180, %v1180
    %v1183 = vsel %vm82, %v1138, 0
    %1185 = vmatprep.subr.bf16.mxu0 0
    %1186 = vmatpush1.bf16.msra.mxu0 %v245
    %1187 = vmatprep.subr.bf16.mxu0 0
    %1188 = vmatpush1.bf16.msra.mxu0 %v246
    %1189 = vmatprep.subr.bf16.mxu0 0
    %1190 = vmatpush1.bf16.msra.mxu0 0
    %1191 = vmatprep.subr.bf16.mxu0 0
    %1192 = vmatpush1.bf16.msra.mxu0 0
    %1193 = vmatprep.subr.bf16.mxu0 0
    %1194 = vmatpush1.bf16.msra.mxu0 0
    %1195 = vmatprep.subr.bf16.mxu0 0
    %1196 = vmatpush1.bf16.msra.mxu0 0
    %1197 = vmatprep.subr.bf16.mxu0 0
    %1198 = vmatpush1.bf16.msra.mxu0 0
    %1199 = vmatprep.subr.bf16.mxu0 0
    %1200 = vmatpush1.bf16.msra.mxu0 0
    %1201 = vmatprep.subr.bf16.mxu0 0
    %1202 = vmatpush1.bf16.msra.mxu0 0
    %1203 = vmatprep.subr.bf16.mxu0 0
    %1204 = vmatpush1.bf16.msra.mxu0 0
    %1205 = vmatprep.subr.bf16.mxu0 0
    %1206 = vmatpush1.bf16.msra.mxu0 0
    %1207 = vmatprep.subr.bf16.mxu0 0
    %1208 = vmatpush1.bf16.msra.mxu0 0
    %1209 = vmatprep.subr.bf16.mxu0 0
    %1210 = vmatpush1.bf16.msra.mxu0 0
    %1211 = vmatprep.subr.bf16.mxu0 0
    %1212 = vmatpush1.bf16.msra.mxu0 0
    %1213 = vmatprep.subr.bf16.mxu0 0
    %1214 = vmatpush1.bf16.msra.mxu0 0
    %1215 = vmatprep.subr.bf16.mxu0 0
    %1216 = vmatpush1.bf16.msra.mxu0 0
    %1217 = vmatprep.mubr.bf16.mxu0 0
    %1218 = vmatmul.mubr.bf16.gmra.mrb[0].mxu0 %v1183
    %v1219 = vpop.f32.mrb[0].mxu0
    %v1220 = vadd.f32 0.0, %v1219
    %v1221 = vpop.f32.mrb[0].mxu0
    %v1222 = vpop.f32.mrb[0].mxu0
    %v1223 = vpop.f32.mrb[0].mxu0
    %1224 = vdwg.mxu0
    %v1226 = vsel %vm82, %v1181, 0
    %1228 = vmatprep.subr.bf16.mxu0 0
    %1229 = vmatpush1.bf16.msra.mxu0 %v297
    %1230 = vmatprep.subr.bf16.mxu0 0
    %1231 = vmatpush1.bf16.msra.mxu0 %v298
    %1232 = vmatprep.subr.bf16.mxu0 0
    %1233 = vmatpush1.bf16.msra.mxu0 0
    %1234 = vmatprep.subr.bf16.mxu0 0
    %1235 = vmatpush1.bf16.msra.mxu0 0
    %1236 = vmatprep.subr.bf16.mxu0 0
    %1237 = vmatpush1.bf16.msra.mxu0 0
    %1238 = vmatprep.subr.bf16.mxu0 0
    %1239 = vmatpush1.bf16.msra.mxu0 0
    %1240 = vmatprep.subr.bf16.mxu0 0
    %1241 = vmatpush1.bf16.msra.mxu0 0
    %1242 = vmatprep.subr.bf16.mxu0 0
    %1243 = vmatpush1.bf16.msra.mxu0 0
    %1244 = vmatprep.subr.bf16.mxu0 0
    %1245 = vmatpush1.bf16.msra.mxu0 0
    %1246 = vmatprep.subr.bf16.mxu0 0
    %1247 = vmatpush1.bf16.msra.mxu0 0
    %1248 = vmatprep.subr.bf16.mxu0 0
    %1249 = vmatpush1.bf16.msra.mxu0 0
    %1250 = vmatprep.subr.bf16.mxu0 0
    %1251 = vmatpush1.bf16.msra.mxu0 0
    %1252 = vmatprep.subr.bf16.mxu0 0
    %1253 = vmatpush1.bf16.msra.mxu0 0
    %1254 = vmatprep.subr.bf16.mxu0 0
    %1255 = vmatpush1.bf16.msra.mxu0 0
    %1256 = vmatprep.subr.bf16.mxu0 0
    %1257 = vmatpush1.bf16.msra.mxu0 0
    %1258 = vmatprep.subr.bf16.mxu0 0
    %1259 = vmatpush1.bf16.msra.mxu0 0
    %1260 = vmatprep.mubr.bf16.mxu0 0
    %1261 = vmatmul.mubr.bf16.gmra.mrb[0].mxu0 %v1226
    %v1262 = vpop.f32.mrb[0].mxu0
    %v1263 = vadd.f32 %v1220, %v1262
    %v1264 = vpop.f32.mrb[0].mxu0
    %v1265 = vpop.f32.mrb[0].mxu0
    %v1266 = vpop.f32.mrb[0].mxu0
    %1267 = vdwg.mxu0
    %v1268 = vadd.f32 %v1263, %v178
    %v1269 = vtanh.pop %v1268
    %v1270 = vpack.c.bf16 %v1269, %v1269
    %v1271 = vunpack.c.l.bf16 %v1270
    %v1272 = vlaneseq
    %v1273 = vshrl.u32 %v1272, 7
    %v1274 = vsub.s32 2, %v1273
    %v1275 = vrot.slane %v31, %v1274
    %v1276 = vmul.f32 %v1271, %v1275
    %v1277 = vsel %vm82, %v1276, 0.0
    %1278 = vadd.xlane.f32.xlu0 %v1277
    %v1279 = vpop.xlane.xlu0 %1278
    %v1280 = vstv %s32
    %v1281 = vadd.f32 %v1279, %v1280
    %v1282 = vlaneseq
    %v1283 = vshrl.u32 %v1282, 7
    %vm1284 = vcmp.le.s32.totalorder %v1283, 4
    %vm1285 = vcmp.eq.s32.totalorder %v1283, 4
    %v1286 = vstv %s33
    %v1287 = vsel %vm1285, %v1286, %v1281
    %v1288 = vsel %vm1284, %v1287, -1e+30
    %v1289 = vrot.slane %v1288, 4
    %v1290 = vmax.f32 %v1288, %v1289
    %v1291 = vrot.slane %v1290, 2
    %v1292 = vmax.f32 %v1290, %v1291
    %v1293 = vrot.slane %v1292, 1
    %v1294 = vmax.f32 %v1292, %v1293
    %v1295 = vsub.f32 %v1287, %v1294
    %v1296 = vmul.f32 %v1295, 1.442695
    %v1297 = vpow.pop %v1296
    %v1298 = vsel %vm1284, %v1297, 0.0
    %v1299 = vrot.slane %v1298, 4
    %v1300 = vadd.f32 %v1298, %v1299
    %v1301 = vrot.slane %v1300, 2
    %v1302 = vadd.f32 %v1300, %v1301
    %v1303 = vrot.slane %v1302, 1
    %v1304 = vadd.f32 %v1302, %v1303
    %v1305 = vrcp.pop %v1304
    %v1306 = vmul.f32 %v1298, %v1305
    %vm1307 = vcmask 7168
    %1308 = vst.msk [vmem:[%s4] sm:$0xff] %vm1307, %v1306
    // Predicated region
    $region22: #{eiie_rnn_forward.1} parent=1 // pred_check
      _
    $region23: #{eiie_rnn_forward.1} parent=1 // pred_check_branch
      %1310 = sbr.rel (0) target = $region25
    $region24: #{eiie_rnn_forward.1} parent=1 // pred_region
      _
    $region25: #{eiie_rnn_forward.1} parent=1 // pred_fallthru
      _
    // Predicated region
    $region26: #{eiie_rnn_forward.1} parent=1 // pred_check
      _
    $region27: #{eiie_rnn_forward.1} parent=1 // pred_check_branch
      %1312 = sbr.rel (0) target = $region29
    $region28: #{eiie_rnn_forward.1} parent=1 // pred_region
      _
    $region29: #{eiie_rnn_forward.1} parent=1 // pred_fallthru
      _
    %1313 = vsyncpa [#allocation3], 1

</llo_original>
